<compile_context>
chip_gen: v5e
topology: v5e:2x2
jax: 0.10.0
libtpu: 0.0.40
codegen_flags: <defaults>
</compile_context>

<pallas_src>
import jax
import jax.numpy as jnp
from jax.experimental import pallas as pl
from jax.experimental.pallas import tpu as pltpu


def _radar_cnn_kernel(p1_ref, w1_ref, b1_ref, w2_ref, b2_ref, out_ref, pp_ref):
    # p1_ref : (Bblk, 4, N, 9)   conv1 im2col patches, grouped by 2x2 pool offset
    # w1_ref : (9, 16)           b1_ref : (1, 16)
    # w2_ref : (9, 16, 32)       b2_ref : (1, 32)
    # out_ref: (1, Bblk, 32)
    # pp_ref : VMEM (Bblk, Hp+2, Wp+2, 16) zero-bordered pooled map (never in HBM)
    Bblk, G, N, K1 = p1_ref.shape            # G=4 pool offsets, N=Hp*Wp, K1=9
    C1 = w1_ref.shape[1]                      # 16
    C2 = w2_ref.shape[2]                      # 32
    _, Hpp, Wpp, _ = pp_ref.shape
    Hp, Wp = Hpp - 2, Wpp - 2

    # ---- conv1: ONE MXU matmul over all Bblk*4*N output positions ----
    patches1 = p1_ref[...].reshape(Bblk * G * N, K1)     # leading-dim collapse only
    y1 = jnp.dot(patches1, w1_ref[...],
                 preferred_element_type=jnp.float32)      # (Bblk*4N, 16)
    # TODO(synk): cast matmul operands to bf16 (keep f32 accumulate) once frames
    # are large enough to be MXU-bound; requires relaxing the f32 test tolerance.

    # ---- MaxPool2d(2): max over the 4 pool-offset groups, then bias + ReLU once
    #      (bias-add and ReLU are monotone, so after-the-max is equivalent). ----
    y1 = y1.reshape(Bblk, G, N, C1)
    m = jnp.maximum(jnp.maximum(y1[:, 0], y1[:, 1]),
                    jnp.maximum(y1[:, 2], y1[:, 3]))       # (Bblk, N, 16)
    pooled = jnp.maximum(m + b1_ref[...], 0.0)             # (Bblk, N, 16)

    # ---- Stage the pooled map with a zero 'SAME' border in VMEM.  Zero only the
    #      1-pixel border (interior fully overwritten below), every step, so this
    #      stays correct when the batch grid axis runs on both TensorCores. ----
    zrow = jnp.zeros((Bblk, 1, Wpp, C1), jnp.float32)
    zcol = jnp.zeros((Bblk, Hpp, 1, C1), jnp.float32)
    pp_ref[:, 0:1, :, :] = zrow
    pp_ref[:, Hp + 1:Hpp, :, :] = zrow
    pp_ref[:, :, 0:1, :] = zcol
    pp_ref[:, :, Wp + 1:Wpp, :] = zcol
    pp_ref[:, 1:Hp + 1, 1:Wp + 1, :] = pooled.reshape(Bblk, Hp, Wp, C1)

    # ---- conv2 as 9 shift-and-accumulate MXU matmuls (no (N,144) patch scratch,
    #      no lane-offset masked stores), + bias + ReLU + AdaptiveAvgPool2d((1,1)).
    acc = jnp.zeros((Bblk * N, C2), jnp.float32)
    for t in range(9):                                     # static unroll, 3x3 taps
        dy, dx = t // 3, t % 3
        rows = pp_ref[:, dy:dy + Hp, dx:dx + Wp, :].reshape(Bblk * N, C1)
        acc = acc + jnp.dot(rows, w2_ref[t],
                            preferred_element_type=jnp.float32)
    # TODO(synk): for H,W >= ~512, tile N with a running avg-pool accumulator so
    # the per-tap row blocks fit v7x's 64 MiB VMEM; re-derive vmem_limit_bytes.
    y2 = jnp.maximum(acc + b2_ref[...], 0.0)               # (Bblk*N, 32)
    out_ref[0] = jnp.mean(y2.reshape(Bblk, N, C2), axis=1)  # (Bblk, 32)


def _pick_bblk(B, max_bblk=32):
    """Largest divisor of B that is <= min(B//2, max_bblk) (>=2 grid steps so
    both v7x TensorCores get work; Bblk>1 amortizes per-step overhead)."""
    if B <= 1:
        return 1
    target = min(max(B // 2, 1), max_bblk)
    for cand in range(target, 0, -1):
        if B % cand == 0:
            return cand
    return 1


def radar_cnn_forward(x, w1, b1, w2, b2, *, max_bblk=32):
    """x: (B,1,H,W) f32.  w1: (16,1,3,3), w2: (32,16,3,3) in PyTorch OIHW layout.
    b1: (16,), b2: (32,).  Returns (B, 32)."""
    B, Cin, H, W = x.shape
    assert Cin == 1 and H % 2 == 0 and W % 2 == 0
    Hp, Wp = H // 2, W // 2
    N = Hp * Wp
    C1, C2 = w1.shape[0], w2.shape[0]
    K1 = 9

    Bblk = _pick_bblk(B, max_bblk)
    nsteps = B // Bblk

    # PyTorch OIHW -> matmul-friendly layouts (tap-major rows: t = dy*3 + dx).
    w1f = jnp.transpose(w1, (2, 3, 1, 0)).reshape(K1 * Cin, C1)   # (9, 16)
    w2f = jnp.transpose(w2, (2, 3, 1, 0)).reshape(K1, C1, C2)     # (9, 16, 32)
    b1f = b1.reshape(1, C1)
    b2f = b2.reshape(1, C2)

    # conv1 im2col grouped by 2x2 max-pool offset (cheap XLA index shuffling).
    # TODO(synk): for large frames (H,W >= ~256) build these patches in-kernel
    # from the raw padded image (cuts the 9x HBM read expansion and the 9-wide,
    # ~14x lane-padded input block); irrelevant at 16x16 where the kernel is
    # per-step-overhead bound.
    x_img = x[:, 0]                                          # (B, H, W)
    x_pad = jnp.pad(x_img, ((0, 0), (1, 1), (1, 1)))
    slabs = [x_pad[:, dy:dy + H, dx:dx + W]
             for dy in range(3) for dx in range(3)]
    p = jnp.stack(slabs, axis=-1)                            # (B, H, W, 9)
    p = p.reshape(B, Hp, 2, Wp, 2, K1).transpose(0, 2, 4, 1, 3, 5)
    p1 = p.reshape(B, 4, N, K1)                              # group = oy*2 + ox

    out = pl.pallas_call(
        _radar_cnn_kernel,
        out_shape=jax.ShapeDtypeStruct((nsteps, Bblk, C2), jnp.float32),
        grid=(nsteps,),
        in_specs=[
            pl.BlockSpec((Bblk, 4, N, K1), lambda b: (b, 0, 0, 0)),
            pl.BlockSpec((K1 * Cin, C1), lambda b: (0, 0)),
            pl.BlockSpec((1, C1), lambda b: (0, 0)),
            pl.BlockSpec((K1, C1, C2), lambda b: (0, 0, 0)),
            pl.BlockSpec((1, C2), lambda b: (0, 0)),
        ],
        out_specs=pl.BlockSpec((1, Bblk, C2), lambda b: (b, 0, 0)),
        scratch_shapes=[
            pltpu.VMEM((Bblk, Hp + 2, Wp + 2, C1), jnp.float32),  # padded pooled map
        ],
        compiler_params=pltpu.CompilerParams(
            dimension_semantics=("parallel",),       # >=2 steps: both v7x TCs usable
            # Tiny footprint here; sweep upward on v5e/v6e (128 MiB physical) when
            # scaling Bblk / frame size.  Do NOT raise on v7x (64 MiB physical).
            vmem_limit_bytes=32 * 1024 * 1024,
        ),
    )(p1, w1f, b1f, w2f, b2f)
    return out.reshape(B, C2)


def reference_forward(x, w1, b1, w2, b2):
    """Pure-JAX reference mirroring the PyTorch module (NCHW, OIHW weights)."""
    dn = ("NCHW", "OIHW", "NCHW")
    prec = jax.lax.Precision.HIGHEST
    y = jax.lax.conv_general_dilated(x, w1, (1, 1), "SAME",
                                     dimension_numbers=dn, precision=prec)
    y = jnp.maximum(y + b1[None, :, None, None], 0.0)
    y = jax.lax.reduce_window(y, -jnp.inf, jax.lax.max,
                              (1, 1, 2, 2), (1, 1, 2, 2), "VALID")
    y = jax.lax.conv_general_dilated(y, w2, (1, 1), "SAME",
                                     dimension_numbers=dn, precision=prec)
    y = jnp.maximum(y + b2[None, :, None, None], 0.0)
    return jnp.mean(y, axis=(2, 3))  # (B, 32)


if __name__ == "__main__":
    key = jax.random.PRNGKey(0)
    kx, k1, k2, k3, k4 = jax.random.split(key, 5)

    B, C, H, W = 2, 1, 16, 16
    x = jax.random.normal(kx, (B, C, H, W), dtype=jnp.float32)

    # Deterministic synthetic parameters in PyTorch's OIHW layout.
    w1 = 0.10 * jax.random.normal(k1, (16, 1, 3, 3), dtype=jnp.float32)
    b1 = 0.01 * jax.random.normal(k2, (16,), dtype=jnp.float32)
    w2 = 0.05 * jax.random.normal(k3, (32, 16, 3, 3), dtype=jnp.float32)
    b2 = 0.01 * jax.random.normal(k4, (32,), dtype=jnp.float32)

    out = jax.block_until_ready(radar_cnn_forward(x, w1, b1, w2, b2))
    ref = jax.block_until_ready(reference_forward(x, w1, b1, w2, b2))

    assert out.shape == (B, 32), out.shape
    err = float(jnp.max(jnp.abs(out - ref)))
    assert jnp.allclose(out, ref, rtol=1e-3, atol=1e-4), err
    print("KERNEL_OK")
</pallas_src>

<mosaic_0001>
module attributes {stable_mosaic.version = 11 : i64} {
  func.func @_radar_cnn_kernel(%arg0: i32, %arg1: memref<1x4x64x9xf32, #tpu.memory_space<vmem>>, %arg2: memref<9x16xf32, #tpu.memory_space<vmem>>, %arg3: memref<1x16xf32, #tpu.memory_space<vmem>>, %arg4: memref<9x16x32xf32, #tpu.memory_space<vmem>>, %arg5: memref<1x32xf32, #tpu.memory_space<vmem>>, %arg6: memref<1x1x32xf32, #tpu.memory_space<vmem>>, %arg7: memref<1x10x10x16xf32, #tpu.memory_space<vmem>>) attributes {dimension_semantics = [#tpu.dimension_semantics<parallel>], iteration_bounds = array<i64: 2>, scalar_prefetch = 0 : i64, scratch_operands = 1 : i64, tpu.core_type = #tpu.core_type<tc>, window_params = [{transform_indices = @transform_0, window_bounds = array<i64: 1, 4, 64, 9>}, {pipeline_mode = #tpu.pipeline_mode<synchronous>, transform_indices = @transform_1, window_bounds = array<i64: 9, 16>}, {pipeline_mode = #tpu.pipeline_mode<synchronous>, transform_indices = @transform_2, window_bounds = array<i64: 1, 16>}, {pipeline_mode = #tpu.pipeline_mode<synchronous>, transform_indices = @transform_3, window_bounds = array<i64: 9, 16, 32>}, {pipeline_mode = #tpu.pipeline_mode<synchronous>, transform_indices = @transform_4, window_bounds = array<i64: 1, 32>}, {transform_indices = @transform_5, window_bounds = array<i64: 1, 1, 32>}]} {
    %c0 = arith.constant 0 : index
    %c0_0 = arith.constant 0 : index
    %c0_1 = arith.constant 0 : index
    %c0_2 = arith.constant 0 : index
    %0 = vector.load %arg1[%c0, %c0_0, %c0_1, %c0_2] : memref<1x4x64x9xf32, #tpu.memory_space<vmem>>, vector<1x4x64x9xf32>
    %1 = vector.shape_cast %0 : vector<1x4x64x9xf32> to vector<256x9xf32>
    %c0_3 = arith.constant 0 : index
    %c0_4 = arith.constant 0 : index
    %2 = vector.load %arg2[%c0_3, %c0_4] : memref<9x16xf32, #tpu.memory_space<vmem>>, vector<9x16xf32>
    %cst = arith.constant dense<0.000000e+00> : vector<256x16xf32>
    %3 = tpu.matmul %1, %2, %cst {dimension_numbers = #tpu.dot_dimension_numbers<[1], [0], [0], [1], [0, 0, 1, 1], [], []>} : vector<256x9xf32>, vector<9x16xf32>, vector<256x16xf32> -> vector<256x16xf32>
    %4 = vector.shape_cast %3 : vector<256x16xf32> to vector<1x4x64x16xf32>
    %5 = vector.extract_strided_slice %4 {offsets = [0, 0, 0, 0], sizes = [1, 1, 64, 16], strides = [1, 1, 1, 1]} : vector<1x4x64x16xf32> to vector<1x1x64x16xf32>
    %6 = vector.shape_cast %5 : vector<1x1x64x16xf32> to vector<1x64x16xf32>
    %7 = vector.extract_strided_slice %4 {offsets = [0, 1, 0, 0], sizes = [1, 1, 64, 16], strides = [1, 1, 1, 1]} : vector<1x4x64x16xf32> to vector<1x1x64x16xf32>
    %8 = vector.shape_cast %7 : vector<1x1x64x16xf32> to vector<1x64x16xf32>
    %9 = arith.maximumf %6, %8 : vector<1x64x16xf32>
    %10 = vector.extract_strided_slice %4 {offsets = [0, 2, 0, 0], sizes = [1, 1, 64, 16], strides = [1, 1, 1, 1]} : vector<1x4x64x16xf32> to vector<1x1x64x16xf32>
    %11 = vector.shape_cast %10 : vector<1x1x64x16xf32> to vector<1x64x16xf32>
    %12 = vector.extract_strided_slice %4 {offsets = [0, 3, 0, 0], sizes = [1, 1, 64, 16], strides = [1, 1, 1, 1]} : vector<1x4x64x16xf32> to vector<1x1x64x16xf32>
    %13 = vector.shape_cast %12 : vector<1x1x64x16xf32> to vector<1x64x16xf32>
    %14 = arith.maximumf %11, %13 : vector<1x64x16xf32>
    %15 = arith.maximumf %9, %14 : vector<1x64x16xf32>
    %c0_5 = arith.constant 0 : index
    %c0_6 = arith.constant 0 : index
    %16 = vector.load %arg3[%c0_5, %c0_6] : memref<1x16xf32, #tpu.memory_space<vmem>>, vector<1x16xf32>
    %17 = vector.shape_cast %16 : vector<1x16xf32> to vector<1x1x16xf32>
    %18 = vector.broadcast %17 : vector<1x1x16xf32> to vector<1x64x16xf32>
    %19 = arith.addf %15, %18 : vector<1x64x16xf32>
    %cst_7 = arith.constant 0.000000e+00 : f32
    %20 = vector.broadcast %cst_7 : f32 to vector<1x64x16xf32>
    %21 = arith.maximumf %19, %20 : vector<1x64x16xf32>
    %cst_8 = arith.constant 0.000000e+00 : f32
    %22 = vector.broadcast %cst_8 : f32 to vector<1x1x10x16xf32>
    %cst_9 = arith.constant 0.000000e+00 : f32
    %23 = vector.broadcast %cst_9 : f32 to vector<1x10x1x16xf32>
    %c0_10 = arith.constant 0 : index
    %c0_11 = arith.constant 0 : index
    %c0_12 = arith.constant 0 : index
    %c0_13 = arith.constant 0 : index
    %24 = vector.load %arg7[%c0_10, %c0_11, %c0_12, %c0_13] : memref<1x10x10x16xf32, #tpu.memory_space<vmem>>, vector<1x1x10x16xf32>
    tpu.vector_store %arg7[%c0_10, %c0_11, %c0_12, %c0_13], %22 {strides = array<i32>} : memref<1x10x10x16xf32, #tpu.memory_space<vmem>>, vector<1x1x10x16xf32>,
    %c0_14 = arith.constant 0 : index
    %c9 = arith.constant 9 : index
    %c0_15 = arith.constant 0 : index
    %c0_16 = arith.constant 0 : index
    %25 = vector.load %arg7[%c0_14, %c9, %c0_15, %c0_16] : memref<1x10x10x16xf32, #tpu.memory_space<vmem>>, vector<1x1x10x16xf32>
    tpu.vector_store %arg7[%c0_14, %c9, %c0_15, %c0_16], %22 {strides = array<i32>} : memref<1x10x10x16xf32, #tpu.memory_space<vmem>>, vector<1x1x10x16xf32>,
    %c0_17 = arith.constant 0 : index
    %c0_18 = arith.constant 0 : index
    %c0_19 = arith.constant 0 : index
    %c0_20 = arith.constant 0 : index
    %26 = vector.load %arg7[%c0_17, %c0_18, %c0_19, %c0_20] : memref<1x10x10x16xf32, #tpu.memory_space<vmem>>, vector<1x10x1x16xf32>
    tpu.vector_store %arg7[%c0_17, %c0_18, %c0_19, %c0_20], %23 {strides = array<i32>} : memref<1x10x10x16xf32, #tpu.memory_space<vmem>>, vector<1x10x1x16xf32>,
    %c0_21 = arith.constant 0 : index
    %c0_22 = arith.constant 0 : index
    %c9_23 = arith.constant 9 : index
    %c0_24 = arith.constant 0 : index
    %27 = vector.load %arg7[%c0_21, %c0_22, %c9_23, %c0_24] : memref<1x10x10x16xf32, #tpu.memory_space<vmem>>, vector<1x10x1x16xf32>
    tpu.vector_store %arg7[%c0_21, %c0_22, %c9_23, %c0_24], %23 {strides = array<i32>} : memref<1x10x10x16xf32, #tpu.memory_space<vmem>>, vector<1x10x1x16xf32>,
    %28 = vector.shape_cast %21 : vector<1x64x16xf32> to vector<1x8x8x16xf32>
    %c0_25 = arith.constant 0 : index
    %c1 = arith.constant 1 : index
    %c1_26 = arith.constant 1 : index
    %c0_27 = arith.constant 0 : index
    %29 = vector.load %arg7[%c0_25, %c1, %c1_26, %c0_27] : memref<1x10x10x16xf32, #tpu.memory_space<vmem>>, vector<1x8x8x16xf32>
    tpu.vector_store %arg7[%c0_25, %c1, %c1_26, %c0_27], %28 {strides = array<i32>} : memref<1x10x10x16xf32, #tpu.memory_space<vmem>>, vector<1x8x8x16xf32>,
    %cst_28 = arith.constant 0.000000e+00 : f32
    %30 = vector.broadcast %cst_28 : f32 to vector<64x32xf32>
    %c0_29 = arith.constant 0 : index
    %c0_30 = arith.constant 0 : index
    %c0_31 = arith.constant 0 : index
    %c0_32 = arith.constant 0 : index
    %31 = vector.load %arg7[%c0_29, %c0_30, %c0_31, %c0_32] : memref<1x10x10x16xf32, #tpu.memory_space<vmem>>, vector<1x8x8x16xf32>
    %32 = vector.shape_cast %31 : vector<1x8x8x16xf32> to vector<64x16xf32>
    %c0_33 = arith.constant 0 : index
    %c0_34 = arith.constant 0 : index
    %c0_35 = arith.constant 0 : index
    %33 = vector.load %arg4[%c0_33, %c0_34, %c0_35] : memref<9x16x32xf32, #tpu.memory_space<vmem>>, vector<1x16x32xf32>
    %34 = vector.shape_cast %33 : vector<1x16x32xf32> to vector<16x32xf32>
    %cst_36 = arith.constant dense<0.000000e+00> : vector<64x32xf32>
    %35 = tpu.matmul %32, %34, %cst_36 {dimension_numbers = #tpu.dot_dimension_numbers<[1], [0], [0], [1], [0, 0, 1, 1], [], []>} : vector<64x16xf32>, vector<16x32xf32>, vector<64x32xf32> -> vector<64x32xf32>
    %36 = arith.addf %30, %35 : vector<64x32xf32>
    %c0_37 = arith.constant 0 : index
    %c0_38 = arith.constant 0 : index
    %c1_39 = arith.constant 1 : index
    %c0_40 = arith.constant 0 : index
    %37 = vector.load %arg7[%c0_37, %c0_38, %c1_39, %c0_40] : memref<1x10x10x16xf32, #tpu.memory_space<vmem>>, vector<1x8x8x16xf32>
    %38 = vector.shape_cast %37 : vector<1x8x8x16xf32> to vector<64x16xf32>
    %c1_41 = arith.constant 1 : index
    %c0_42 = arith.constant 0 : index
    %c0_43 = arith.constant 0 : index
    %39 = vector.load %arg4[%c1_41, %c0_42, %c0_43] : memref<9x16x32xf32, #tpu.memory_space<vmem>>, vector<1x16x32xf32>
    %40 = vector.shape_cast %39 : vector<1x16x32xf32> to vector<16x32xf32>
    %cst_44 = arith.constant dense<0.000000e+00> : vector<64x32xf32>
    %41 = tpu.matmul %38, %40, %cst_44 {dimension_numbers = #tpu.dot_dimension_numbers<[1], [0], [0], [1], [0, 0, 1, 1], [], []>} : vector<64x16xf32>, vector<16x32xf32>, vector<64x32xf32> -> vector<64x32xf32>
    %42 = arith.addf %36, %41 : vector<64x32xf32>
    %c0_45 = arith.constant 0 : index
    %c0_46 = arith.constant 0 : index
    %c2 = arith.constant 2 : index
    %c0_47 = arith.constant 0 : index
    %43 = vector.load %arg7[%c0_45, %c0_46, %c2, %c0_47] : memref<1x10x10x16xf32, #tpu.memory_space<vmem>>, vector<1x8x8x16xf32>
    %44 = vector.shape_cast %43 : vector<1x8x8x16xf32> to vector<64x16xf32>
    %c2_48 = arith.constant 2 : index
    %c0_49 = arith.constant 0 : index
    %c0_50 = arith.constant 0 : index
    %45 = vector.load %arg4[%c2_48, %c0_49, %c0_50] : memref<9x16x32xf32, #tpu.memory_space<vmem>>, vector<1x16x32xf32>
    %46 = vector.shape_cast %45 : vector<1x16x32xf32> to vector<16x32xf32>
    %cst_51 = arith.constant dense<0.000000e+00> : vector<64x32xf32>
    %47 = tpu.matmul %44, %46, %cst_51 {dimension_numbers = #tpu.dot_dimension_numbers<[1], [0], [0], [1], [0, 0, 1, 1], [], []>} : vector<64x16xf32>, vector<16x32xf32>, vector<64x32xf32> -> vector<64x32xf32>
    %48 = arith.addf %42, %47 : vector<64x32xf32>
    %c0_52 = arith.constant 0 : index
    %c1_53 = arith.constant 1 : index
    %c0_54 = arith.constant 0 : index
    %c0_55 = arith.constant 0 : index
    %49 = vector.load %arg7[%c0_52, %c1_53, %c0_54, %c0_55] : memref<1x10x10x16xf32, #tpu.memory_space<vmem>>, vector<1x8x8x16xf32>
    %50 = vector.shape_cast %49 : vector<1x8x8x16xf32> to vector<64x16xf32>
    %c3 = arith.constant 3 : index
    %c0_56 = arith.constant 0 : index
    %c0_57 = arith.constant 0 : index
    %51 = vector.load %arg4[%c3, %c0_56, %c0_57] : memref<9x16x32xf32, #tpu.memory_space<vmem>>, vector<1x16x32xf32>
    %52 = vector.shape_cast %51 : vector<1x16x32xf32> to vector<16x32xf32>
    %cst_58 = arith.constant dense<0.000000e+00> : vector<64x32xf32>
    %53 = tpu.matmul %50, %52, %cst_58 {dimension_numbers = #tpu.dot_dimension_numbers<[1], [0], [0], [1], [0, 0, 1, 1], [], []>} : vector<64x16xf32>, vector<16x32xf32>, vector<64x32xf32> -> vector<64x32xf32>
    %54 = arith.addf %48, %53 : vector<64x32xf32>
    %c0_59 = arith.constant 0 : index
    %c1_60 = arith.constant 1 : index
    %c1_61 = arith.constant 1 : index
    %c0_62 = arith.constant 0 : index
    %55 = vector.load %arg7[%c0_59, %c1_60, %c1_61, %c0_62] : memref<1x10x10x16xf32, #tpu.memory_space<vmem>>, vector<1x8x8x16xf32>
    %56 = vector.shape_cast %55 : vector<1x8x8x16xf32> to vector<64x16xf32>
    %c4 = arith.constant 4 : index
    %c0_63 = arith.constant 0 : index
    %c0_64 = arith.constant 0 : index
    %57 = vector.load %arg4[%c4, %c0_63, %c0_64] : memref<9x16x32xf32, #tpu.memory_space<vmem>>, vector<1x16x32xf32>
    %58 = vector.shape_cast %57 : vector<1x16x32xf32> to vector<16x32xf32>
    %cst_65 = arith.constant dense<0.000000e+00> : vector<64x32xf32>
    %59 = tpu.matmul %56, %58, %cst_65 {dimension_numbers = #tpu.dot_dimension_numbers<[1], [0], [0], [1], [0, 0, 1, 1], [], []>} : vector<64x16xf32>, vector<16x32xf32>, vector<64x32xf32> -> vector<64x32xf32>
    %60 = arith.addf %54, %59 : vector<64x32xf32>
    %c0_66 = arith.constant 0 : index
    %c1_67 = arith.constant 1 : index
    %c2_68 = arith.constant 2 : index
    %c0_69 = arith.constant 0 : index
    %61 = vector.load %arg7[%c0_66, %c1_67, %c2_68, %c0_69] : memref<1x10x10x16xf32, #tpu.memory_space<vmem>>, vector<1x8x8x16xf32>
    %62 = vector.shape_cast %61 : vector<1x8x8x16xf32> to vector<64x16xf32>
    %c5 = arith.constant 5 : index
    %c0_70 = arith.constant 0 : index
    %c0_71 = arith.constant 0 : index
    %63 = vector.load %arg4[%c5, %c0_70, %c0_71] : memref<9x16x32xf32, #tpu.memory_space<vmem>>, vector<1x16x32xf32>
    %64 = vector.shape_cast %63 : vector<1x16x32xf32> to vector<16x32xf32>
    %cst_72 = arith.constant dense<0.000000e+00> : vector<64x32xf32>
    %65 = tpu.matmul %62, %64, %cst_72 {dimension_numbers = #tpu.dot_dimension_numbers<[1], [0], [0], [1], [0, 0, 1, 1], [], []>} : vector<64x16xf32>, vector<16x32xf32>, vector<64x32xf32> -> vector<64x32xf32>
    %66 = arith.addf %60, %65 : vector<64x32xf32>
    %c0_73 = arith.constant 0 : index
    %c2_74 = arith.constant 2 : index
    %c0_75 = arith.constant 0 : index
    %c0_76 = arith.constant 0 : index
    %67 = vector.load %arg7[%c0_73, %c2_74, %c0_75, %c0_76] : memref<1x10x10x16xf32, #tpu.memory_space<vmem>>, vector<1x8x8x16xf32>
    %68 = vector.shape_cast %67 : vector<1x8x8x16xf32> to vector<64x16xf32>
    %c6 = arith.constant 6 : index
    %c0_77 = arith.constant 0 : index
    %c0_78 = arith.constant 0 : index
    %69 = vector.load %arg4[%c6, %c0_77, %c0_78] : memref<9x16x32xf32, #tpu.memory_space<vmem>>, vector<1x16x32xf32>
    %70 = vector.shape_cast %69 : vector<1x16x32xf32> to vector<16x32xf32>
    %cst_79 = arith.constant dense<0.000000e+00> : vector<64x32xf32>
    %71 = tpu.matmul %68, %70, %cst_79 {dimension_numbers = #tpu.dot_dimension_numbers<[1], [0], [0], [1], [0, 0, 1, 1], [], []>} : vector<64x16xf32>, vector<16x32xf32>, vector<64x32xf32> -> vector<64x32xf32>
    %72 = arith.addf %66, %71 : vector<64x32xf32>
    %c0_80 = arith.constant 0 : index
    %c2_81 = arith.constant 2 : index
    %c1_82 = arith.constant 1 : index
    %c0_83 = arith.constant 0 : index
    %73 = vector.load %arg7[%c0_80, %c2_81, %c1_82, %c0_83] : memref<1x10x10x16xf32, #tpu.memory_space<vmem>>, vector<1x8x8x16xf32>
    %74 = vector.shape_cast %73 : vector<1x8x8x16xf32> to vector<64x16xf32>
    %c7 = arith.constant 7 : index
    %c0_84 = arith.constant 0 : index
    %c0_85 = arith.constant 0 : index
    %75 = vector.load %arg4[%c7, %c0_84, %c0_85] : memref<9x16x32xf32, #tpu.memory_space<vmem>>, vector<1x16x32xf32>
    %76 = vector.shape_cast %75 : vector<1x16x32xf32> to vector<16x32xf32>
    %cst_86 = arith.constant dense<0.000000e+00> : vector<64x32xf32>
    %77 = tpu.matmul %74, %76, %cst_86 {dimension_numbers = #tpu.dot_dimension_numbers<[1], [0], [0], [1], [0, 0, 1, 1], [], []>} : vector<64x16xf32>, vector<16x32xf32>, vector<64x32xf32> -> vector<64x32xf32>
    %78 = arith.addf %72, %77 : vector<64x32xf32>
    %c0_87 = arith.constant 0 : index
    %c2_88 = arith.constant 2 : index
    %c2_89 = arith.constant 2 : index
    %c0_90 = arith.constant 0 : index
    %79 = vector.load %arg7[%c0_87, %c2_88, %c2_89, %c0_90] : memref<1x10x10x16xf32, #tpu.memory_space<vmem>>, vector<1x8x8x16xf32>
    %80 = vector.shape_cast %79 : vector<1x8x8x16xf32> to vector<64x16xf32>
    %c8 = arith.constant 8 : index
    %c0_91 = arith.constant 0 : index
    %c0_92 = arith.constant 0 : index
    %81 = vector.load %arg4[%c8, %c0_91, %c0_92] : memref<9x16x32xf32, #tpu.memory_space<vmem>>, vector<1x16x32xf32>
    %82 = vector.shape_cast %81 : vector<1x16x32xf32> to vector<16x32xf32>
    %cst_93 = arith.constant dense<0.000000e+00> : vector<64x32xf32>
    %83 = tpu.matmul %80, %82, %cst_93 {dimension_numbers = #tpu.dot_dimension_numbers<[1], [0], [0], [1], [0, 0, 1, 1], [], []>} : vector<64x16xf32>, vector<16x32xf32>, vector<64x32xf32> -> vector<64x32xf32>
    %84 = arith.addf %78, %83 : vector<64x32xf32>
    %c0_94 = arith.constant 0 : index
    %c0_95 = arith.constant 0 : index
    %85 = vector.load %arg5[%c0_94, %c0_95] : memref<1x32xf32, #tpu.memory_space<vmem>>, vector<1x32xf32>
    %86 = vector.broadcast %85 : vector<1x32xf32> to vector<64x32xf32>
    %87 = arith.addf %84, %86 : vector<64x32xf32>
    %cst_96 = arith.constant 0.000000e+00 : f32
    %88 = vector.broadcast %cst_96 : f32 to vector<64x32xf32>
    %89 = arith.maximumf %87, %88 : vector<64x32xf32>
    %90 = vector.shape_cast %89 : vector<64x32xf32> to vector<1x64x32xf32>
    %cst_97 = arith.constant dense<0.000000e+00> : vector<1x32xf32>
    %91 = vector.multi_reduction <add>, %90, %cst_97 [1] : vector<1x64x32xf32> to vector<1x32xf32>
    %cst_98 = arith.constant 6.400000e+01 : f32
    %92 = vector.broadcast %cst_98 : f32 to vector<1x32xf32>
    %93 = arith.divf %91, %92 : vector<1x32xf32>
    %c0_99 = arith.constant 0 : index
    %c0_100 = arith.constant 0 : index
    %c0_101 = arith.constant 0 : index
    %94 = vector.load %arg6[%c0_99, %c0_100, %c0_101] : memref<1x1x32xf32, #tpu.memory_space<vmem>>, vector<1x1x32xf32>
    %95 = vector.shape_cast %94 : vector<1x1x32xf32> to vector<1x32xf32>
    %96 = vector.shape_cast %93 : vector<1x32xf32> to vector<1x1x32xf32>
    tpu.vector_store %arg6[%c0_99, %c0_100, %c0_101], %96 {strides = array<i32>} : memref<1x1x32xf32, #tpu.memory_space<vmem>>, vector<1x1x32xf32>,
    return
  }
  func.func @transform_0(%arg0: i32) -> (i32, i32, i32, i32) {
    %c0_i32 = arith.constant 0 : i32
    %c0_i32_0 = arith.constant 0 : i32
    %c0_i32_1 = arith.constant 0 : i32
    %c0_i32_2 = arith.constant 0 : i32
    return %arg0, %c0_i32, %c0_i32_0, %c0_i32_1 : i32, i32, i32, i32
  }
  func.func @transform_1(%arg0: i32) -> (i32, i32) {
    %c0_i32 = arith.constant 0 : i32
    %c0_i32_0 = arith.constant 0 : i32
    %c0_i32_1 = arith.constant 0 : i32
    return %c0_i32, %c0_i32_0 : i32, i32
  }
  func.func @transform_2(%arg0: i32) -> (i32, i32) {
    %c0_i32 = arith.constant 0 : i32
    %c0_i32_0 = arith.constant 0 : i32
    %c0_i32_1 = arith.constant 0 : i32
    return %c0_i32, %c0_i32_0 : i32, i32
  }
  func.func @transform_3(%arg0: i32) -> (i32, i32, i32) {
    %c0_i32 = arith.constant 0 : i32
    %c0_i32_0 = arith.constant 0 : i32
    %c0_i32_1 = arith.constant 0 : i32
    %c0_i32_2 = arith.constant 0 : i32
    return %c0_i32, %c0_i32_0, %c0_i32_1 : i32, i32, i32
  }
  func.func @transform_4(%arg0: i32) -> (i32, i32) {
    %c0_i32 = arith.constant 0 : i32
    %c0_i32_0 = arith.constant 0 : i32
    %c0_i32_1 = arith.constant 0 : i32
    return %c0_i32, %c0_i32_0 : i32, i32
  }
  func.func @transform_5(%arg0: i32) -> (i32, i32, i32) {
    %c0_i32 = arith.constant 0 : i32
    %c0_i32_0 = arith.constant 0 : i32
    %c0_i32_1 = arith.constant 0 : i32
    return %arg0, %c0_i32, %c0_i32_0 : i32, i32, i32
  }
}

</mosaic_0001>

<llo_original>
// kernel: tpu_custom_call.1
$region0: #{tpu_custom_call.1}
  #allocation0 [shape = 'u32[]', space=smem, size = 0x4, offset = 0x4, fixed_abs, tag = 'smem constant byte address 0x4 - core index']
  #allocation1 [shape = 'u32[72,128]{1,0:T(1,128)}', space=vmem, size = 0x9000, scoped, tag = 'internal scratch']
  #allocation2 [shape = 'f32[1,10,10,16]{3,2,1,0:T(8,128)}', space=vmem, size = 0x14000, scoped, tag = 'scratch operand']
  %s0 = inlined_call_operand.vmem [shape: f32[2,4,64,9], index: 0, kind: input, shape index: {}]
  %s1 = inlined_call_operand.vmem [shape: f32[9,16], index: 1, kind: input, shape index: {}]
  %s2 = inlined_call_operand.vmem [shape: f32[1,16], index: 2, kind: input, shape index: {}]
  %s3 = inlined_call_operand.vmem [shape: f32[9,16,32], index: 3, kind: input, shape index: {}]
  %s4 = inlined_call_operand.vmem [shape: f32[1,32], index: 4, kind: input, shape index: {}]
  %s5 = inlined_call_operand.hbm [shape: f32[2,1,32], index: 5, kind: output, shape index: {}]
  %s6 = sld [smem:[#allocation0]]
  $region53: #{tpu_custom_call.1} parent=0
    _
  %s8 = ssub.s32 1, %s6
  %s9 = scalar_select 0, %s8, %s6
  $region1: #{tpu_custom_call.1} parent=0
    #allocation3 [shape = 'u8[1024]{0}', space=vmem, size = 0x400, scoped, tag = 'output window, operand 0']
    #allocation4 [shape = 's32[2]{0}', space=sflag, size = 0x8, scoped, tag = 'scoped memory for tpu_custom_call.1']
    %10 = vsyncpa [#allocation4], 0
    %s11 = scalar_lea.sflag [#allocation4], 1
    %12 = vsyncpa %s11, 0
    loop: start=0, step=1, limit=4
    $region2: #{tpu_custom_call.1} parent=1 // loop_pre_header
      _
    $region3: #{tpu_custom_call.1} parent=1 // loop_header
      %s14 = sphi 0, %s18
      %p15 = scmp.ge.s32.totalorder %s14, 4
      %s24 = sphi 0, %s26
      %s27 = sphi 0, %s24
      %s28 = sphi 0, %s27
      %s44 = sphi 0, %s28
      %s48 = sphi 0, %s48
      %s50 = sphi 0, %s48
      %s51 = sphi 0, %s50
      %s65 = sphi 0, %s51
      %s69 = sphi 0, %s69
      %s71 = sphi 0, %s69
      %s72 = sphi 0, %s71
      %s86 = sphi 0, %s72
      %s90 = sphi 0, %s90
      %s92 = sphi 0, %s90
      %s93 = sphi 0, %s92
      %s107 = sphi 0, %s93
      %s111 = sphi 0, %s111
      %s113 = sphi 0, %s111
      %s114 = sphi 0, %s113
      %s128 = sphi 0, %s114
      %s134 = sphi 0, %s136
      %s137 = sphi 0, %s134
      %s138 = sphi 0, %s137
      %s154 = sphi 0, %s138
    $region4: #{tpu_custom_call.1} parent=1 // loop_header_branch
      %17 = sbr.rel (%p15) target = $region8
    $region5: #{tpu_custom_call.1} parent=1 // loop_body
      %s19 = ssub.s32 %s14, 1
      %s20 = ssub.s32 %s14, 2
      %s21 = sadd.s32 %s14, 1
      %s22 = ssub.s32 %s14, %s21
      %p23 = scmp.eq.s32.totalorder %s22, 0
      %s25 = sadd.s32 %s24, 1
      %s26 = scalar_select %p23, %s24, %s25
      %p29 = pneg %p23
      %p30 = scmp.eq.s32.totalorder %s14, 1
      %p31 = por %p29, %p30
      %p32 = scmp.ne.s32.totalorder %s24, %s27
      %p33 = scmp.eq.s32.totalorder %s14, 0
      %p34 = por %p32, %p33
      %p35 = scmp.ne.s32.totalorder %s24, %s27
      %p36 = scmp.eq.s32.totalorder %s19, 1
      %p37 = por %p35, %p36
      %p38 = scmp.ne.s32.totalorder %s27, %s28
      %p39 = scmp.eq.s32.totalorder %s19, 0
      %p40 = por %p38, %p39
      %p41 = scmp.ne.s32.totalorder %s27, %s28
      %p42 = scmp.eq.s32.totalorder %s20, 1
      %p43 = por %p41, %p42
      %p45 = scmp.ne.s32.totalorder %s28, %s44
      %p46 = scmp.eq.s32.totalorder %s20, 0
      %p47 = por %p45, %p46
      %s49 = sadd.s32 %s48, 1
      %p52 = scmp.eq.s32.totalorder %s14, 1
      %p53 = scmp.ne.s32.totalorder %s48, %s50
      %p54 = scmp.eq.s32.totalorder %s14, 0
      %p55 = por %p53, %p54
      %p56 = scmp.ne.s32.totalorder %s48, %s50
      %p57 = scmp.eq.s32.totalorder %s19, 1
      %p58 = por %p56, %p57
      %p59 = scmp.ne.s32.totalorder %s50, %s51
      %p60 = scmp.eq.s32.totalorder %s19, 0
      %p61 = por %p59, %p60
      %p62 = scmp.ne.s32.totalorder %s50, %s51
      %p63 = scmp.eq.s32.totalorder %s20, 1
      %p64 = por %p62, %p63
      %p66 = scmp.ne.s32.totalorder %s51, %s65
      %p67 = scmp.eq.s32.totalorder %s20, 0
      %p68 = por %p66, %p67
      %s70 = sadd.s32 %s69, 1
      %p73 = scmp.eq.s32.totalorder %s14, 1
      %p74 = scmp.ne.s32.totalorder %s69, %s71
      %p75 = scmp.eq.s32.totalorder %s14, 0
      %p76 = por %p74, %p75
      %p77 = scmp.ne.s32.totalorder %s69, %s71
      %p78 = scmp.eq.s32.totalorder %s19, 1
      %p79 = por %p77, %p78
      %p80 = scmp.ne.s32.totalorder %s71, %s72
      %p81 = scmp.eq.s32.totalorder %s19, 0
      %p82 = por %p80, %p81
      %p83 = scmp.ne.s32.totalorder %s71, %s72
      %p84 = scmp.eq.s32.totalorder %s20, 1
      %p85 = por %p83, %p84
      %p87 = scmp.ne.s32.totalorder %s72, %s86
      %p88 = scmp.eq.s32.totalorder %s20, 0
      %p89 = por %p87, %p88
      %s91 = sadd.s32 %s90, 1
      %p94 = scmp.eq.s32.totalorder %s14, 1
      %p95 = scmp.ne.s32.totalorder %s90, %s92
      %p96 = scmp.eq.s32.totalorder %s14, 0
      %p97 = por %p95, %p96
      %p98 = scmp.ne.s32.totalorder %s90, %s92
      %p99 = scmp.eq.s32.totalorder %s19, 1
      %p100 = por %p98, %p99
      %p101 = scmp.ne.s32.totalorder %s92, %s93
      %p102 = scmp.eq.s32.totalorder %s19, 0
      %p103 = por %p101, %p102
      %p104 = scmp.ne.s32.totalorder %s92, %s93
      %p105 = scmp.eq.s32.totalorder %s20, 1
      %p106 = por %p104, %p105
      %p108 = scmp.ne.s32.totalorder %s93, %s107
      %p109 = scmp.eq.s32.totalorder %s20, 0
      %p110 = por %p108, %p109
      %s112 = sadd.s32 %s111, 1
      %p115 = scmp.eq.s32.totalorder %s14, 1
      %p116 = scmp.ne.s32.totalorder %s111, %s113
      %p117 = scmp.eq.s32.totalorder %s14, 0
      %p118 = por %p116, %p117
      %p119 = scmp.ne.s32.totalorder %s111, %s113
      %p120 = scmp.eq.s32.totalorder %s19, 1
      %p121 = por %p119, %p120
      %p122 = scmp.ne.s32.totalorder %s113, %s114
      %p123 = scmp.eq.s32.totalorder %s19, 0
      %p124 = por %p122, %p123
      %p125 = scmp.ne.s32.totalorder %s113, %s114
      %p126 = scmp.eq.s32.totalorder %s20, 1
      %p127 = por %p125, %p126
      %p129 = scmp.ne.s32.totalorder %s114, %s128
      %p130 = scmp.eq.s32.totalorder %s20, 0
      %p131 = por %p129, %p130
      %s132 = ssub.s32 %s14, %s21
      %p133 = scmp.eq.s32.totalorder %s132, 0
      %s135 = sadd.s32 %s134, 1
      %s136 = scalar_select %p133, %s134, %s135
      %p139 = pneg %p133
      %p140 = scmp.eq.s32.totalorder %s14, 1
      %p141 = por %p139, %p140
      %p142 = scmp.ne.s32.totalorder %s134, %s137
      %p143 = scmp.eq.s32.totalorder %s14, 0
      %p144 = por %p142, %p143
      %p145 = scmp.ne.s32.totalorder %s134, %s137
      %p146 = scmp.eq.s32.totalorder %s19, 1
      %p147 = por %p145, %p146
      %p148 = scmp.ne.s32.totalorder %s137, %s138
      %p149 = scmp.eq.s32.totalorder %s19, 0
      %p150 = por %p148, %p149
      %p151 = scmp.ne.s32.totalorder %s137, %s138
      %p152 = scmp.eq.s32.totalorder %s20, 1
      %p153 = por %p151, %p152
      %p155 = scmp.ne.s32.totalorder %s138, %s154
      %p156 = scmp.eq.s32.totalorder %s20, 0
      %p157 = por %p155, %p156
      %p158 = scmp.le.s32.totalorder 1, %s14
      %p159 = scmp.lt.s32.totalorder %s14, 3
      %p160 = pnand %p158, %p159
      %p161 = pneg %p160
      // Predicated region
      $region9: #{tpu_custom_call.1} parent=5 // pred_check
        _
      $region10: #{tpu_custom_call.1} parent=5 // pred_check_branch
        %163 = sbr.rel (%p160) target = $region12
      $region11: #{tpu_custom_call.1} parent=5 // pred_region
        %s164 = ssub.s32 %s14, 1
        // Predicated region
        $region13: #{tpu_custom_call.1} parent=11 // pred_check
          %p165 = pneg %p61
        $region14: #{tpu_custom_call.1} parent=11 // pred_check_branch
          %167 = sbr.rel (%p165) target = $region16
        $region15: #{tpu_custom_call.1} parent=11 // pred_region
          _
        $region16: #{tpu_custom_call.1} parent=11 // pred_fallthru
          _
        // Predicated region
        $region17: #{tpu_custom_call.1} parent=11 // pred_check
          %p168 = pneg %p82
        $region18: #{tpu_custom_call.1} parent=11 // pred_check_branch
          %170 = sbr.rel (%p168) target = $region20
        $region19: #{tpu_custom_call.1} parent=11 // pred_region
          _
        $region20: #{tpu_custom_call.1} parent=11 // pred_fallthru
          _
        // Predicated region
        $region21: #{tpu_custom_call.1} parent=11 // pred_check
          %p171 = pneg %p103
        $region22: #{tpu_custom_call.1} parent=11 // pred_check_branch
          %173 = sbr.rel (%p171) target = $region24
        $region23: #{tpu_custom_call.1} parent=11 // pred_region
          _
        $region24: #{tpu_custom_call.1} parent=11 // pred_fallthru
          _
        // Predicated region
        $region25: #{tpu_custom_call.1} parent=11 // pred_check
          %p174 = pneg %p124
        $region26: #{tpu_custom_call.1} parent=11 // pred_check_branch
          %176 = sbr.rel (%p174) target = $region28
        $region27: #{tpu_custom_call.1} parent=11 // pred_region
          _
        $region28: #{tpu_custom_call.1} parent=11 // pred_fallthru
          _
      $region12: #{tpu_custom_call.1} parent=5 // pred_fallthru
        _
      %p177 = scmp.lt.s32.totalorder %s14, 2
      // Predicated region
      $region29: #{tpu_custom_call.1} parent=5 // pred_check
        %p178 = pneg %p177
      $region30: #{tpu_custom_call.1} parent=5 // pred_check_branch
        %180 = sbr.rel (%p178) target = $region32
      $region31: #{tpu_custom_call.1} parent=5 // pred_region
        // Predicated region
        $region33: #{tpu_custom_call.1} parent=31 // pred_check
          %p181 = pneg %p34
        $region34: #{tpu_custom_call.1} parent=31 // pred_check_branch
          %183 = sbr.rel (%p181) target = $region36
        $region35: #{tpu_custom_call.1} parent=31 // pred_region
          %p184 = scmp.lt.s32.totalorder %s14, 1
          %s185 = scalar_select %p184, %s14, 1
          %s186 = smul.addr %s185, 32
          %s187 = smul.addr %s186, 8
          %s188 = scalar_lea.vmem %s0, %s187
        $region36: #{tpu_custom_call.1} parent=31 // pred_fallthru
          _
      $region32: #{tpu_custom_call.1} parent=5 // pred_fallthru
        _
      %p189 = scmp.le.s32.totalorder 1, %s14
      %p190 = scmp.lt.s32.totalorder %s14, 3
      %p191 = pnand %p189, %p190
      %p192 = pneg %p191
      // Predicated region
      $region37: #{tpu_custom_call.1} parent=5 // pred_check
        _
      $region38: #{tpu_custom_call.1} parent=5 // pred_check_branch
        %194 = sbr.rel (%p191) target = $region40
      $region39: #{tpu_custom_call.1} parent=5 // pred_region
        %s195 = ssub.s32 %s14, 1
        %p196 = scmp.lt.s32.totalorder %s19, 1
        %s197 = scalar_select %p196, %s19, 1
        %s198 = smul.addr %s197, 32
        %s199 = smul.addr %s198, 8
        %s200 = scalar_lea.vmem %s0, %s199
        %p201 = pneg %p40
        %p202 = pneg %p37
        %p203 = pneg %p61
        %p204 = pneg %p58
        %p205 = pneg %p82
        %p206 = pneg %p79
        %p207 = pneg %p103
        %p208 = pneg %p100
        %p209 = pneg %p124
        %p210 = pneg %p121
        %p211 = pneg %p150
        %p212 = pneg %p147
        %s213 = sand.u32 %s137, 1
        %s214 = scalar_lea.sflag [#allocation4], %s213
        %s215 = sand.u32 %s137, 1
        %s216 = scalar_lea.vmem [#allocation3], %s215
        %p217 = scmp.lt.s32.totalorder %s19, 1
        %s218 = scalar_select %p217, %s19, 1
        %s219 = smul.addr %s218, 32
        %s220 = smul.addr %s219, 8
        %s221 = scalar_lea.vmem %s0, %s220
        %v222 = vld [vmem:[%s221] sm:$0xff]
        %v223 = vld [vmem:[%s221 + $0x8] sm:$0xff]
        %v224 = vld [vmem:[%s221 + $0x10] sm:$0xff]
        %v225 = vld [vmem:[%s221 + $0x18] sm:$0xff]
        %v226 = vld [vmem:[%s221 + $0x20] sm:$0xff]
        %v227 = vld [vmem:[%s221 + $0x28] sm:$0xff]
        %v228 = vld [vmem:[%s221 + $0x30] sm:$0xff]
        %v229 = vld [vmem:[%s221 + $0x38] sm:$0xff]
        %v230 = vld [vmem:[%s221 + $0x40] sm:$0xff]
        %v231 = vld [vmem:[%s221 + $0x48] sm:$0xff]
        %v232 = vld [vmem:[%s221 + $0x50] sm:$0xff]
        %v233 = vld [vmem:[%s221 + $0x58] sm:$0xff]
        %v234 = vld [vmem:[%s221 + $0x60] sm:$0xff]
        %v235 = vld [vmem:[%s221 + $0x68] sm:$0xff]
        %v236 = vld [vmem:[%s221 + $0x70] sm:$0xff]
        %v237 = vld [vmem:[%s221 + $0x78] sm:$0xff]
        %v238 = vld [vmem:[%s221 + $0x80] sm:$0xff]
        %v239 = vld [vmem:[%s221 + $0x88] sm:$0xff]
        %v240 = vld [vmem:[%s221 + $0x90] sm:$0xff]
        %v241 = vld [vmem:[%s221 + $0x98] sm:$0xff]
        %v242 = vld [vmem:[%s221 + $0xa0] sm:$0xff]
        %v243 = vld [vmem:[%s221 + $0xa8] sm:$0xff]
        %v244 = vld [vmem:[%s221 + $0xb0] sm:$0xff]
        %v245 = vld [vmem:[%s221 + $0xb8] sm:$0xff]
        %v246 = vld [vmem:[%s221 + $0xc0] sm:$0xff]
        %v247 = vld [vmem:[%s221 + $0xc8] sm:$0xff]
        %v248 = vld [vmem:[%s221 + $0xd0] sm:$0xff]
        %v249 = vld [vmem:[%s221 + $0xd8] sm:$0xff]
        %v250 = vld [vmem:[%s221 + $0xe0] sm:$0xff]
        %v251 = vld [vmem:[%s221 + $0xe8] sm:$0xff]
        %v252 = vld [vmem:[%s221 + $0xf0] sm:$0xff]
        %v253 = vld [vmem:[%s221 + $0xf8] sm:$0xff]
        %v254 = vld [vmem:[%s1] sm:$0xff]
        %v255 = vld [vmem:[%s1 + $0x8] sm:$0x1]
        %vm256 = vcmask 72704
        %v258 = vsel %vm256, %v222, 0
        %v261 = vsel %vm256, %v223, 0
        %v264 = vsel %vm256, %v224, 0
        %v267 = vsel %vm256, %v225, 0
        %v270 = vsel %vm256, %v226, 0
        %v273 = vsel %vm256, %v227, 0
        %v276 = vsel %vm256, %v228, 0
        %v279 = vsel %vm256, %v229, 0
        %v282 = vsel %vm256, %v230, 0
        %v285 = vsel %vm256, %v231, 0
        %v288 = vsel %vm256, %v232, 0
        %v291 = vsel %vm256, %v233, 0
        %v294 = vsel %vm256, %v234, 0
        %v297 = vsel %vm256, %v235, 0
        %v300 = vsel %vm256, %v236, 0
        %v303 = vsel %vm256, %v237, 0
        %v306 = vsel %vm256, %v238, 0
        %v309 = vsel %vm256, %v239, 0
        %v312 = vsel %vm256, %v240, 0
        %v315 = vsel %vm256, %v241, 0
        %v318 = vsel %vm256, %v242, 0
        %v321 = vsel %vm256, %v243, 0
        %v324 = vsel %vm256, %v244, 0
        %v327 = vsel %vm256, %v245, 0
        %v330 = vsel %vm256, %v246, 0
        %v333 = vsel %vm256, %v247, 0
        %v336 = vsel %vm256, %v248, 0
        %v339 = vsel %vm256, %v249, 0
        %v342 = vsel %vm256, %v250, 0
        %v345 = vsel %vm256, %v251, 0
        %v348 = vsel %vm256, %v252, 0
        %v351 = vsel %vm256, %v253, 0
        %vm353 = vcmask 1040384
        %v355 = vsel %vm353, %v255, 0
        %357 = vmatpush.msra.mxu0 0.0
        %358 = vmatpush.msra.mxu0 0.0
        %359 = vmatpush.msra.mxu0 0.0
        %360 = vmatpush.msra.mxu0 0.0
        %361 = vmatpush.msra.mxu0 0.0
        %362 = vmatpush.msra.mxu0 0.0
        %363 = vmatpush.msra.mxu0 0.0
        %364 = vmatpush.msra.mxu0 0.0
        %365 = vmatpush.msra.mxu0 0.0
        %366 = vmatpush.msra.mxu0 0.0
        %367 = vmatpush.msra.mxu0 0.0
        %368 = vmatpush.msra.mxu0 0.0
        %369 = vmatpush.msra.mxu0 0.0
        %370 = vmatpush.msra.mxu0 0.0
        %371 = vmatpush.msra.mxu0 %v355
        %372 = vmatpush.msra.mxu0 %v254
        %373 = vmatmul.f32.gmra.mxu0 %v258
        %v374 = vpop.f32.mrf.mxu0
        %v375 = vadd.f32 0.0, %v374
        %376 = vmatmul.f32.gmra.mxu0 %v261
        %v377 = vpop.f32.mrf.mxu0
        %v378 = vadd.f32 0.0, %v377
        %379 = vmatmul.f32.gmra.mxu0 %v264
        %v380 = vpop.f32.mrf.mxu0
        %v381 = vadd.f32 0.0, %v380
        %382 = vmatmul.f32.gmra.mxu0 %v267
        %v383 = vpop.f32.mrf.mxu0
        %v384 = vadd.f32 0.0, %v383
        %385 = vmatmul.f32.gmra.mxu0 %v270
        %v386 = vpop.f32.mrf.mxu0
        %v387 = vadd.f32 0.0, %v386
        %388 = vmatmul.f32.gmra.mxu0 %v273
        %v389 = vpop.f32.mrf.mxu0
        %v390 = vadd.f32 0.0, %v389
        %391 = vmatmul.f32.gmra.mxu0 %v276
        %v392 = vpop.f32.mrf.mxu0
        %v393 = vadd.f32 0.0, %v392
        %394 = vmatmul.f32.gmra.mxu0 %v279
        %v395 = vpop.f32.mrf.mxu0
        %v396 = vadd.f32 0.0, %v395
        %397 = vmatmul.f32.gmra.mxu0 %v282
        %v398 = vpop.f32.mrf.mxu0
        %v399 = vadd.f32 0.0, %v398
        %400 = vmatmul.f32.gmra.mxu0 %v285
        %v401 = vpop.f32.mrf.mxu0
        %v402 = vadd.f32 0.0, %v401
        %403 = vmatmul.f32.gmra.mxu0 %v288
        %v404 = vpop.f32.mrf.mxu0
        %v405 = vadd.f32 0.0, %v404
        %406 = vmatmul.f32.gmra.mxu0 %v291
        %v407 = vpop.f32.mrf.mxu0
        %v408 = vadd.f32 0.0, %v407
        %409 = vmatmul.f32.gmra.mxu0 %v294
        %v410 = vpop.f32.mrf.mxu0
        %v411 = vadd.f32 0.0, %v410
        %412 = vmatmul.f32.gmra.mxu0 %v297
        %v413 = vpop.f32.mrf.mxu0
        %v414 = vadd.f32 0.0, %v413
        %415 = vmatmul.f32.gmra.mxu0 %v300
        %v416 = vpop.f32.mrf.mxu0
        %v417 = vadd.f32 0.0, %v416
        %418 = vmatmul.f32.gmra.mxu0 %v303
        %v419 = vpop.f32.mrf.mxu0
        %v420 = vadd.f32 0.0, %v419
        %421 = vmatmul.f32.gmra.mxu0 %v306
        %v422 = vpop.f32.mrf.mxu0
        %v423 = vadd.f32 0.0, %v422
        %424 = vmatmul.f32.gmra.mxu0 %v309
        %v425 = vpop.f32.mrf.mxu0
        %v426 = vadd.f32 0.0, %v425
        %427 = vmatmul.f32.gmra.mxu0 %v312
        %v428 = vpop.f32.mrf.mxu0
        %v429 = vadd.f32 0.0, %v428
        %430 = vmatmul.f32.gmra.mxu0 %v315
        %v431 = vpop.f32.mrf.mxu0
        %v432 = vadd.f32 0.0, %v431
        %433 = vmatmul.f32.gmra.mxu0 %v318
        %v434 = vpop.f32.mrf.mxu0
        %v435 = vadd.f32 0.0, %v434
        %436 = vmatmul.f32.gmra.mxu0 %v321
        %v437 = vpop.f32.mrf.mxu0
        %v438 = vadd.f32 0.0, %v437
        %439 = vmatmul.f32.gmra.mxu0 %v324
        %v440 = vpop.f32.mrf.mxu0
        %v441 = vadd.f32 0.0, %v440
        %442 = vmatmul.f32.gmra.mxu0 %v327
        %v443 = vpop.f32.mrf.mxu0
        %v444 = vadd.f32 0.0, %v443
        %445 = vmatmul.f32.gmra.mxu0 %v330
        %v446 = vpop.f32.mrf.mxu0
        %v447 = vadd.f32 0.0, %v446
        %448 = vmatmul.f32.gmra.mxu0 %v333
        %v449 = vpop.f32.mrf.mxu0
        %v450 = vadd.f32 0.0, %v449
        %451 = vmatmul.f32.gmra.mxu0 %v336
        %v452 = vpop.f32.mrf.mxu0
        %v453 = vadd.f32 0.0, %v452
        %454 = vmatmul.f32.gmra.mxu0 %v339
        %v455 = vpop.f32.mrf.mxu0
        %v456 = vadd.f32 0.0, %v455
        %457 = vmatmul.f32.gmra.mxu0 %v342
        %v458 = vpop.f32.mrf.mxu0
        %v459 = vadd.f32 0.0, %v458
        %460 = vmatmul.f32.gmra.mxu0 %v345
        %v461 = vpop.f32.mrf.mxu0
        %v462 = vadd.f32 0.0, %v461
        %463 = vmatmul.f32.gmra.mxu0 %v348
        %v464 = vpop.f32.mrf.mxu0
        %v465 = vadd.f32 0.0, %v464
        %466 = vmatmul.f32.gmra.mxu0 %v351
        %v467 = vpop.f32.mrf.mxu0
        %v468 = vadd.f32 0.0, %v467
        %469 = vdwg.mxu0
        %v470 = vmax.f32 %v375, %v399
        %v471 = vmax.f32 %v378, %v402
        %v472 = vmax.f32 %v381, %v405
        %v473 = vmax.f32 %v384, %v408
        %v474 = vmax.f32 %v387, %v411
        %v475 = vmax.f32 %v390, %v414
        %v476 = vmax.f32 %v393, %v417
        %v477 = vmax.f32 %v396, %v420
        %v478 = vmax.f32 %v423, %v447
        %v479 = vmax.f32 %v426, %v450
        %v480 = vmax.f32 %v429, %v453
        %v481 = vmax.f32 %v432, %v456
        %v482 = vmax.f32 %v435, %v459
        %v483 = vmax.f32 %v438, %v462
        %v484 = vmax.f32 %v441, %v465
        %v485 = vmax.f32 %v444, %v468
        %v486 = vmax.f32 %v470, %v478
        %v487 = vmax.f32 %v471, %v479
        %v488 = vmax.f32 %v472, %v480
        %v489 = vmax.f32 %v473, %v481
        %v490 = vmax.f32 %v474, %v482
        %v491 = vmax.f32 %v475, %v483
        %v492 = vmax.f32 %v476, %v484
        %v493 = vmax.f32 %v477, %v485
        %v494 = vld [vmem:[%s2] sm:$0x1]
        %v496 = vperm.slane %v494, 0
        %v498 = vadd.f32 %v486, %v496
        %v499 = vadd.f32 %v487, %v496
        %v500 = vadd.f32 %v488, %v496
        %v501 = vadd.f32 %v489, %v496
        %v502 = vadd.f32 %v490, %v496
        %v503 = vadd.f32 %v491, %v496
        %v504 = vadd.f32 %v492, %v496
        %v505 = vadd.f32 %v493, %v496
        %v506 = vmax.f32 %v498, 0.0
        %v507 = vmax.f32 %v499, 0.0
        %v508 = vmax.f32 %v500, 0.0
        %v509 = vmax.f32 %v501, 0.0
        %v510 = vmax.f32 %v502, 0.0
        %v511 = vmax.f32 %v503, 0.0
        %v512 = vmax.f32 %v504, 0.0
        %v513 = vmax.f32 %v505, 0.0
        %vm514 = vcmask 130048
        %515 = vst.msk [vmem:[#allocation2] sm:$0xff] %vm514, 0.0
        %vm516 = vcmask 123904
        %517 = vst.msk [vmem:[#allocation2 + $0x8] sm:$0x3] %vm516, 0.0
        %s518 = scalar_lea.vmem [#allocation2], 144
        %519 = vst.msk [vmem:[%s518] sm:$0xff] %vm514, 0.0
        %520 = vst.msk [vmem:[%s518 + $0x8] sm:$0x3] %vm516, 0.0
        %vm521 = vcmask 122880
        %522 = vst.msk [vmem:[#allocation2] sm:$0x1] %vm521, 0.0
        %523 = vst.msk [vmem:[#allocation2 + $0x10] sm:$0x1] %vm521, 0.0
        %524 = vst.msk [vmem:[#allocation2 + $0x20] sm:$0x1] %vm521, 0.0
        %525 = vst.msk [vmem:[#allocation2 + $0x30] sm:$0x1] %vm521, 0.0
        %526 = vst.msk [vmem:[#allocation2 + $0x40] sm:$0x1] %vm521, 0.0
        %527 = vst.msk [vmem:[#allocation2 + $0x50] sm:$0x1] %vm521, 0.0
        %528 = vst.msk [vmem:[#allocation2 + $0x60] sm:$0x1] %vm521, 0.0
        %529 = vst.msk [vmem:[#allocation2 + $0x70] sm:$0x1] %vm521, 0.0
        %530 = vst.msk [vmem:[#allocation2 + $0x80] sm:$0x1] %vm521, 0.0
        %531 = vst.msk [vmem:[#allocation2 + $0x90] sm:$0x1] %vm521, 0.0
        %532 = vst.msk [vmem:[#allocation2 + $0x9] sm:$0x1] %vm521, 0.0
        %533 = vst.msk [vmem:[#allocation2 + $0x19] sm:$0x1] %vm521, 0.0
        %534 = vst.msk [vmem:[#allocation2 + $0x29] sm:$0x1] %vm521, 0.0
        %535 = vst.msk [vmem:[#allocation2 + $0x39] sm:$0x1] %vm521, 0.0
        %536 = vst.msk [vmem:[#allocation2 + $0x49] sm:$0x1] %vm521, 0.0
        %537 = vst.msk [vmem:[#allocation2 + $0x59] sm:$0x1] %vm521, 0.0
        %538 = vst.msk [vmem:[#allocation2 + $0x69] sm:$0x1] %vm521, 0.0
        %539 = vst.msk [vmem:[#allocation2 + $0x79] sm:$0x1] %vm521, 0.0
        %540 = vst.msk [vmem:[#allocation2 + $0x89] sm:$0x1] %vm521, 0.0
        %541 = vst.msk [vmem:[#allocation2 + $0x99] sm:$0x1] %vm521, 0.0
        %s542 = scalar_lea.vmem [#allocation2], 16
        %543 = vst.msk [vmem:[%s542 + $0x1] sm:$0xff] %vm514, %v506
        %544 = vst.msk [vmem:[%s542 + $0x11] sm:$0xff] %vm514, %v507
        %545 = vst.msk [vmem:[%s542 + $0x21] sm:$0xff] %vm514, %v508
        %546 = vst.msk [vmem:[%s542 + $0x31] sm:$0xff] %vm514, %v509
        %547 = vst.msk [vmem:[%s542 + $0x41] sm:$0xff] %vm514, %v510
        %548 = vst.msk [vmem:[%s542 + $0x51] sm:$0xff] %vm514, %v511
        %549 = vst.msk [vmem:[%s542 + $0x61] sm:$0xff] %vm514, %v512
        %550 = vst.msk [vmem:[%s542 + $0x71] sm:$0xff] %vm514, %v513
        %v551 = vld [vmem:[#allocation2] sm:$0xff]
        %v552 = vld [vmem:[#allocation2 + $0x10] sm:$0xff]
        %v553 = vld [vmem:[#allocation2 + $0x20] sm:$0xff]
        %v554 = vld [vmem:[#allocation2 + $0x30] sm:$0xff]
        %v555 = vld [vmem:[#allocation2 + $0x40] sm:$0xff]
        %v556 = vld [vmem:[#allocation2 + $0x50] sm:$0xff]
        %v557 = vld [vmem:[#allocation2 + $0x60] sm:$0xff]
        %v558 = vld [vmem:[#allocation2 + $0x70] sm:$0xff]
        %v559 = vld [vmem:[%s3] sm:$0xff]
        %v560 = vld [vmem:[%s3 + $0x8] sm:$0xff]
        %v561 = vld [vmem:[#allocation2 + $0x1] sm:$0xff]
        %v562 = vld [vmem:[#allocation2 + $0x11] sm:$0xff]
        %v563 = vld [vmem:[#allocation2 + $0x21] sm:$0xff]
        %v564 = vld [vmem:[#allocation2 + $0x31] sm:$0xff]
        %v565 = vld [vmem:[#allocation2 + $0x41] sm:$0xff]
        %v566 = vld [vmem:[#allocation2 + $0x51] sm:$0xff]
        %v567 = vld [vmem:[#allocation2 + $0x61] sm:$0xff]
        %v568 = vld [vmem:[#allocation2 + $0x71] sm:$0xff]
        %s569 = scalar_lea.vmem %s3, 16
        %v570 = vld [vmem:[%s569] sm:$0xff]
        %v571 = vld [vmem:[%s569 + $0x8] sm:$0xff]
        %v573 = vsel %vm514, %v561, 0
        %v576 = vsel %vm514, %v562, 0
        %v579 = vsel %vm514, %v563, 0
        %v582 = vsel %vm514, %v564, 0
        %v585 = vsel %vm514, %v565, 0
        %v588 = vsel %vm514, %v566, 0
        %v591 = vsel %vm514, %v567, 0
        %v594 = vsel %vm514, %v568, 0
        %596 = vmatpush.msra.mxu0 0.0
        %597 = vmatpush.msra.mxu0 0.0
        %598 = vmatpush.msra.mxu0 0.0
        %599 = vmatpush.msra.mxu0 0.0
        %600 = vmatpush.msra.mxu0 0.0
        %601 = vmatpush.msra.mxu0 0.0
        %602 = vmatpush.msra.mxu0 0.0
        %603 = vmatpush.msra.mxu0 0.0
        %604 = vmatpush.msra.mxu0 0.0
        %605 = vmatpush.msra.mxu0 0.0
        %606 = vmatpush.msra.mxu0 0.0
        %607 = vmatpush.msra.mxu0 0.0
        %608 = vmatpush.msra.mxu0 0.0
        %609 = vmatpush.msra.mxu0 0.0
        %610 = vmatpush.msra.mxu0 %v571
        %611 = vmatpush.msra.mxu0 %v570
        %612 = vmatmul.f32.gmra.mxu0 %v573
        %v613 = vpop.f32.mrf.mxu0
        %v614 = vadd.f32 0.0, %v613
        %615 = vmatmul.f32.gmra.mxu0 %v576
        %v616 = vpop.f32.mrf.mxu0
        %v617 = vadd.f32 0.0, %v616
        %618 = vmatmul.f32.gmra.mxu0 %v579
        %v619 = vpop.f32.mrf.mxu0
        %v620 = vadd.f32 0.0, %v619
        %621 = vmatmul.f32.gmra.mxu0 %v582
        %v622 = vpop.f32.mrf.mxu0
        %v623 = vadd.f32 0.0, %v622
        %624 = vmatmul.f32.gmra.mxu0 %v585
        %v625 = vpop.f32.mrf.mxu0
        %v626 = vadd.f32 0.0, %v625
        %627 = vmatmul.f32.gmra.mxu0 %v588
        %v628 = vpop.f32.mrf.mxu0
        %v629 = vadd.f32 0.0, %v628
        %630 = vmatmul.f32.gmra.mxu0 %v591
        %v631 = vpop.f32.mrf.mxu0
        %v632 = vadd.f32 0.0, %v631
        %633 = vmatmul.f32.gmra.mxu0 %v594
        %v634 = vpop.f32.mrf.mxu0
        %v635 = vadd.f32 0.0, %v634
        %636 = vdwg.mxu0
        %v638 = vsel %vm514, %v551, 0
        %v641 = vsel %vm514, %v552, 0
        %v644 = vsel %vm514, %v553, 0
        %v647 = vsel %vm514, %v554, 0
        %v650 = vsel %vm514, %v555, 0
        %v653 = vsel %vm514, %v556, 0
        %v656 = vsel %vm514, %v557, 0
        %v659 = vsel %vm514, %v558, 0
        %661 = vmatpush.msra.mxu0 0.0
        %662 = vmatpush.msra.mxu0 0.0
        %663 = vmatpush.msra.mxu0 0.0
        %664 = vmatpush.msra.mxu0 0.0
        %665 = vmatpush.msra.mxu0 0.0
        %666 = vmatpush.msra.mxu0 0.0
        %667 = vmatpush.msra.mxu0 0.0
        %668 = vmatpush.msra.mxu0 0.0
        %669 = vmatpush.msra.mxu0 0.0
        %670 = vmatpush.msra.mxu0 0.0
        %671 = vmatpush.msra.mxu0 0.0
        %672 = vmatpush.msra.mxu0 0.0
        %673 = vmatpush.msra.mxu0 0.0
        %674 = vmatpush.msra.mxu0 0.0
        %675 = vmatpush.msra.mxu0 %v560
        %676 = vmatpush.msra.mxu0 %v559
        %677 = vmatmul.f32.gmra.mxu0 %v638
        %v678 = vpop.f32.mrf.mxu0
        %v679 = vadd.f32 %v614, %v678
        %680 = vmatmul.f32.gmra.mxu0 %v641
        %v681 = vpop.f32.mrf.mxu0
        %v682 = vadd.f32 %v617, %v681
        %683 = vmatmul.f32.gmra.mxu0 %v644
        %v684 = vpop.f32.mrf.mxu0
        %v685 = vadd.f32 %v620, %v684
        %686 = vmatmul.f32.gmra.mxu0 %v647
        %v687 = vpop.f32.mrf.mxu0
        %v688 = vadd.f32 %v623, %v687
        %689 = vmatmul.f32.gmra.mxu0 %v650
        %v690 = vpop.f32.mrf.mxu0
        %v691 = vadd.f32 %v626, %v690
        %692 = vmatmul.f32.gmra.mxu0 %v653
        %v693 = vpop.f32.mrf.mxu0
        %v694 = vadd.f32 %v629, %v693
        %695 = vmatmul.f32.gmra.mxu0 %v656
        %v696 = vpop.f32.mrf.mxu0
        %v697 = vadd.f32 %v632, %v696
        %698 = vmatmul.f32.gmra.mxu0 %v659
        %v699 = vpop.f32.mrf.mxu0
        %v700 = vadd.f32 %v635, %v699
        %701 = vdwg.mxu0
        %v702 = vld [vmem:[#allocation2 + $0x2] sm:$0xff]
        %v703 = vld [vmem:[#allocation2 + $0x12] sm:$0xff]
        %v704 = vld [vmem:[#allocation2 + $0x22] sm:$0xff]
        %v705 = vld [vmem:[#allocation2 + $0x32] sm:$0xff]
        %v706 = vld [vmem:[#allocation2 + $0x42] sm:$0xff]
        %v707 = vld [vmem:[#allocation2 + $0x52] sm:$0xff]
        %v708 = vld [vmem:[#allocation2 + $0x62] sm:$0xff]
        %v709 = vld [vmem:[#allocation2 + $0x72] sm:$0xff]
        %s710 = scalar_lea.vmem %s3, 32
        %v711 = vld [vmem:[%s710] sm:$0xff]
        %v712 = vld [vmem:[%s710 + $0x8] sm:$0xff]
        %v714 = vsel %vm514, %v702, 0
        %v717 = vsel %vm514, %v703, 0
        %v720 = vsel %vm514, %v704, 0
        %v723 = vsel %vm514, %v705, 0
        %v726 = vsel %vm514, %v706, 0
        %v729 = vsel %vm514, %v707, 0
        %v732 = vsel %vm514, %v708, 0
        %v735 = vsel %vm514, %v709, 0
        %737 = vmatpush.msra.mxu0 0.0
        %738 = vmatpush.msra.mxu0 0.0
        %739 = vmatpush.msra.mxu0 0.0
        %740 = vmatpush.msra.mxu0 0.0
        %741 = vmatpush.msra.mxu0 0.0
        %742 = vmatpush.msra.mxu0 0.0
        %743 = vmatpush.msra.mxu0 0.0
        %744 = vmatpush.msra.mxu0 0.0
        %745 = vmatpush.msra.mxu0 0.0
        %746 = vmatpush.msra.mxu0 0.0
        %747 = vmatpush.msra.mxu0 0.0
        %748 = vmatpush.msra.mxu0 0.0
        %749 = vmatpush.msra.mxu0 0.0
        %750 = vmatpush.msra.mxu0 0.0
        %751 = vmatpush.msra.mxu0 %v712
        %752 = vmatpush.msra.mxu0 %v711
        %753 = vmatmul.f32.gmra.mxu0 %v714
        %v754 = vpop.f32.mrf.mxu0
        %v755 = vadd.f32 0.0, %v754
        %756 = vmatmul.f32.gmra.mxu0 %v717
        %v757 = vpop.f32.mrf.mxu0
        %v758 = vadd.f32 0.0, %v757
        %759 = vmatmul.f32.gmra.mxu0 %v720
        %v760 = vpop.f32.mrf.mxu0
        %v761 = vadd.f32 0.0, %v760
        %762 = vmatmul.f32.gmra.mxu0 %v723
        %v763 = vpop.f32.mrf.mxu0
        %v764 = vadd.f32 0.0, %v763
        %765 = vmatmul.f32.gmra.mxu0 %v726
        %v766 = vpop.f32.mrf.mxu0
        %v767 = vadd.f32 0.0, %v766
        %768 = vmatmul.f32.gmra.mxu0 %v729
        %v769 = vpop.f32.mrf.mxu0
        %v770 = vadd.f32 0.0, %v769
        %771 = vmatmul.f32.gmra.mxu0 %v732
        %v772 = vpop.f32.mrf.mxu0
        %v773 = vadd.f32 0.0, %v772
        %774 = vmatmul.f32.gmra.mxu0 %v735
        %v775 = vpop.f32.mrf.mxu0
        %v776 = vadd.f32 0.0, %v775
        %777 = vdwg.mxu0
        %v778 = vadd.f32 %v679, %v755
        %v779 = vadd.f32 %v682, %v758
        %v780 = vadd.f32 %v685, %v761
        %v781 = vadd.f32 %v688, %v764
        %v782 = vadd.f32 %v691, %v767
        %v783 = vadd.f32 %v694, %v770
        %v784 = vadd.f32 %v697, %v773
        %v785 = vadd.f32 %v700, %v776
        %v786 = vld [vmem:[%s542] sm:$0xff]
        %v787 = vld [vmem:[%s542 + $0x10] sm:$0xff]
        %v788 = vld [vmem:[%s542 + $0x20] sm:$0xff]
        %v789 = vld [vmem:[%s542 + $0x30] sm:$0xff]
        %v790 = vld [vmem:[%s542 + $0x40] sm:$0xff]
        %v791 = vld [vmem:[%s542 + $0x50] sm:$0xff]
        %v792 = vld [vmem:[%s542 + $0x60] sm:$0xff]
        %v793 = vld [vmem:[%s542 + $0x70] sm:$0xff]
        %s794 = scalar_lea.vmem %s3, 48
        %v795 = vld [vmem:[%s794] sm:$0xff]
        %v796 = vld [vmem:[%s794 + $0x8] sm:$0xff]
        %v798 = vsel %vm514, %v786, 0
        %v801 = vsel %vm514, %v787, 0
        %v804 = vsel %vm514, %v788, 0
        %v807 = vsel %vm514, %v789, 0
        %v810 = vsel %vm514, %v790, 0
        %v813 = vsel %vm514, %v791, 0
        %v816 = vsel %vm514, %v792, 0
        %v819 = vsel %vm514, %v793, 0
        %821 = vmatpush.msra.mxu0 0.0
        %822 = vmatpush.msra.mxu0 0.0
        %823 = vmatpush.msra.mxu0 0.0
        %824 = vmatpush.msra.mxu0 0.0
        %825 = vmatpush.msra.mxu0 0.0
        %826 = vmatpush.msra.mxu0 0.0
        %827 = vmatpush.msra.mxu0 0.0
        %828 = vmatpush.msra.mxu0 0.0
        %829 = vmatpush.msra.mxu0 0.0
        %830 = vmatpush.msra.mxu0 0.0
        %831 = vmatpush.msra.mxu0 0.0
        %832 = vmatpush.msra.mxu0 0.0
        %833 = vmatpush.msra.mxu0 0.0
        %834 = vmatpush.msra.mxu0 0.0
        %835 = vmatpush.msra.mxu0 %v796
        %836 = vmatpush.msra.mxu0 %v795
        %837 = vmatmul.f32.gmra.mxu0 %v798
        %v838 = vpop.f32.mrf.mxu0
        %v839 = vadd.f32 0.0, %v838
        %840 = vmatmul.f32.gmra.mxu0 %v801
        %v841 = vpop.f32.mrf.mxu0
        %v842 = vadd.f32 0.0, %v841
        %843 = vmatmul.f32.gmra.mxu0 %v804
        %v844 = vpop.f32.mrf.mxu0
        %v845 = vadd.f32 0.0, %v844
        %846 = vmatmul.f32.gmra.mxu0 %v807
        %v847 = vpop.f32.mrf.mxu0
        %v848 = vadd.f32 0.0, %v847
        %849 = vmatmul.f32.gmra.mxu0 %v810
        %v850 = vpop.f32.mrf.mxu0
        %v851 = vadd.f32 0.0, %v850
        %852 = vmatmul.f32.gmra.mxu0 %v813
        %v853 = vpop.f32.mrf.mxu0
        %v854 = vadd.f32 0.0, %v853
        %855 = vmatmul.f32.gmra.mxu0 %v816
        %v856 = vpop.f32.mrf.mxu0
        %v857 = vadd.f32 0.0, %v856
        %858 = vmatmul.f32.gmra.mxu0 %v819
        %v859 = vpop.f32.mrf.mxu0
        %v860 = vadd.f32 0.0, %v859
        %861 = vdwg.mxu0
        %v862 = vadd.f32 %v778, %v839
        %v863 = vadd.f32 %v779, %v842
        %v864 = vadd.f32 %v780, %v845
        %v865 = vadd.f32 %v781, %v848
        %v866 = vadd.f32 %v782, %v851
        %v867 = vadd.f32 %v783, %v854
        %v868 = vadd.f32 %v784, %v857
        %v869 = vadd.f32 %v785, %v860
        %v870 = vld [vmem:[%s542 + $0x1] sm:$0xff]
        %v871 = vld [vmem:[%s542 + $0x11] sm:$0xff]
        %v872 = vld [vmem:[%s542 + $0x21] sm:$0xff]
        %v873 = vld [vmem:[%s542 + $0x31] sm:$0xff]
        %v874 = vld [vmem:[%s542 + $0x41] sm:$0xff]
        %v875 = vld [vmem:[%s542 + $0x51] sm:$0xff]
        %v876 = vld [vmem:[%s542 + $0x61] sm:$0xff]
        %v877 = vld [vmem:[%s542 + $0x71] sm:$0xff]
        %s878 = scalar_lea.vmem %s3, 64
        %v879 = vld [vmem:[%s878] sm:$0xff]
        %v880 = vld [vmem:[%s878 + $0x8] sm:$0xff]
        %v882 = vsel %vm514, %v870, 0
        %v885 = vsel %vm514, %v871, 0
        %v888 = vsel %vm514, %v872, 0
        %v891 = vsel %vm514, %v873, 0
        %v894 = vsel %vm514, %v874, 0
        %v897 = vsel %vm514, %v875, 0
        %v900 = vsel %vm514, %v876, 0
        %v903 = vsel %vm514, %v877, 0
        %905 = vmatpush.msra.mxu0 0.0
        %906 = vmatpush.msra.mxu0 0.0
        %907 = vmatpush.msra.mxu0 0.0
        %908 = vmatpush.msra.mxu0 0.0
        %909 = vmatpush.msra.mxu0 0.0
        %910 = vmatpush.msra.mxu0 0.0
        %911 = vmatpush.msra.mxu0 0.0
        %912 = vmatpush.msra.mxu0 0.0
        %913 = vmatpush.msra.mxu0 0.0
        %914 = vmatpush.msra.mxu0 0.0
        %915 = vmatpush.msra.mxu0 0.0
        %916 = vmatpush.msra.mxu0 0.0
        %917 = vmatpush.msra.mxu0 0.0
        %918 = vmatpush.msra.mxu0 0.0
        %919 = vmatpush.msra.mxu0 %v880
        %920 = vmatpush.msra.mxu0 %v879
        %921 = vmatmul.f32.gmra.mxu0 %v882
        %v922 = vpop.f32.mrf.mxu0
        %v923 = vadd.f32 0.0, %v922
        %924 = vmatmul.f32.gmra.mxu0 %v885
        %v925 = vpop.f32.mrf.mxu0
        %v926 = vadd.f32 0.0, %v925
        %927 = vmatmul.f32.gmra.mxu0 %v888
        %v928 = vpop.f32.mrf.mxu0
        %v929 = vadd.f32 0.0, %v928
        %930 = vmatmul.f32.gmra.mxu0 %v891
        %v931 = vpop.f32.mrf.mxu0
        %v932 = vadd.f32 0.0, %v931
        %933 = vmatmul.f32.gmra.mxu0 %v894
        %v934 = vpop.f32.mrf.mxu0
        %v935 = vadd.f32 0.0, %v934
        %936 = vmatmul.f32.gmra.mxu0 %v897
        %v937 = vpop.f32.mrf.mxu0
        %v938 = vadd.f32 0.0, %v937
        %939 = vmatmul.f32.gmra.mxu0 %v900
        %v940 = vpop.f32.mrf.mxu0
        %v941 = vadd.f32 0.0, %v940
        %942 = vmatmul.f32.gmra.mxu0 %v903
        %v943 = vpop.f32.mrf.mxu0
        %v944 = vadd.f32 0.0, %v943
        %945 = vdwg.mxu0
        %v946 = vadd.f32 %v862, %v923
        %v947 = vadd.f32 %v863, %v926
        %v948 = vadd.f32 %v864, %v929
        %v949 = vadd.f32 %v865, %v932
        %v950 = vadd.f32 %v866, %v935
        %v951 = vadd.f32 %v867, %v938
        %v952 = vadd.f32 %v868, %v941
        %v953 = vadd.f32 %v869, %v944
        %v954 = vld [vmem:[%s542 + $0x2] sm:$0xff]
        %v955 = vld [vmem:[%s542 + $0x12] sm:$0xff]
        %v956 = vld [vmem:[%s542 + $0x22] sm:$0xff]
        %v957 = vld [vmem:[%s542 + $0x32] sm:$0xff]
        %v958 = vld [vmem:[%s542 + $0x42] sm:$0xff]
        %v959 = vld [vmem:[%s542 + $0x52] sm:$0xff]
        %v960 = vld [vmem:[%s542 + $0x62] sm:$0xff]
        %v961 = vld [vmem:[%s542 + $0x72] sm:$0xff]
        %s962 = scalar_lea.vmem %s3, 80
        %v963 = vld [vmem:[%s962] sm:$0xff]
        %v964 = vld [vmem:[%s962 + $0x8] sm:$0xff]
        %v966 = vsel %vm514, %v954, 0
        %v969 = vsel %vm514, %v955, 0
        %v972 = vsel %vm514, %v956, 0
        %v975 = vsel %vm514, %v957, 0
        %v978 = vsel %vm514, %v958, 0
        %v981 = vsel %vm514, %v959, 0
        %v984 = vsel %vm514, %v960, 0
        %v987 = vsel %vm514, %v961, 0
        %989 = vmatpush.msra.mxu0 0.0
        %990 = vmatpush.msra.mxu0 0.0
        %991 = vmatpush.msra.mxu0 0.0
        %992 = vmatpush.msra.mxu0 0.0
        %993 = vmatpush.msra.mxu0 0.0
        %994 = vmatpush.msra.mxu0 0.0
        %995 = vmatpush.msra.mxu0 0.0
        %996 = vmatpush.msra.mxu0 0.0
        %997 = vmatpush.msra.mxu0 0.0
        %998 = vmatpush.msra.mxu0 0.0
        %999 = vmatpush.msra.mxu0 0.0
        %1000 = vmatpush.msra.mxu0 0.0
        %1001 = vmatpush.msra.mxu0 0.0
        %1002 = vmatpush.msra.mxu0 0.0
        %1003 = vmatpush.msra.mxu0 %v964
        %1004 = vmatpush.msra.mxu0 %v963
        %1005 = vmatmul.f32.gmra.mxu0 %v966
        %v1006 = vpop.f32.mrf.mxu0
        %v1007 = vadd.f32 0.0, %v1006
        %1008 = vmatmul.f32.gmra.mxu0 %v969
        %v1009 = vpop.f32.mrf.mxu0
        %v1010 = vadd.f32 0.0, %v1009
        %1011 = vmatmul.f32.gmra.mxu0 %v972
        %v1012 = vpop.f32.mrf.mxu0
        %v1013 = vadd.f32 0.0, %v1012
        %1014 = vmatmul.f32.gmra.mxu0 %v975
        %v1015 = vpop.f32.mrf.mxu0
        %v1016 = vadd.f32 0.0, %v1015
        %1017 = vmatmul.f32.gmra.mxu0 %v978
        %v1018 = vpop.f32.mrf.mxu0
        %v1019 = vadd.f32 0.0, %v1018
        %1020 = vmatmul.f32.gmra.mxu0 %v981
        %v1021 = vpop.f32.mrf.mxu0
        %v1022 = vadd.f32 0.0, %v1021
        %1023 = vmatmul.f32.gmra.mxu0 %v984
        %v1024 = vpop.f32.mrf.mxu0
        %v1025 = vadd.f32 0.0, %v1024
        %1026 = vmatmul.f32.gmra.mxu0 %v987
        %v1027 = vpop.f32.mrf.mxu0
        %v1028 = vadd.f32 0.0, %v1027
        %1029 = vdwg.mxu0
        %v1030 = vadd.f32 %v946, %v1007
        %v1031 = vadd.f32 %v947, %v1010
        %v1032 = vadd.f32 %v948, %v1013
        %v1033 = vadd.f32 %v949, %v1016
        %v1034 = vadd.f32 %v950, %v1019
        %v1035 = vadd.f32 %v951, %v1022
        %v1036 = vadd.f32 %v952, %v1025
        %v1037 = vadd.f32 %v953, %v1028
        %s1038 = scalar_lea.vmem [#allocation2], 32
        %v1039 = vld [vmem:[%s1038] sm:$0xff]
        %v1040 = vld [vmem:[%s1038 + $0x10] sm:$0xff]
        %v1041 = vld [vmem:[%s1038 + $0x20] sm:$0xff]
        %v1042 = vld [vmem:[%s1038 + $0x30] sm:$0xff]
        %v1043 = vld [vmem:[%s1038 + $0x40] sm:$0xff]
        %v1044 = vld [vmem:[%s1038 + $0x50] sm:$0xff]
        %v1045 = vld [vmem:[%s1038 + $0x60] sm:$0xff]
        %v1046 = vld [vmem:[%s1038 + $0x70] sm:$0xff]
        %s1047 = scalar_lea.vmem %s3, 96
        %v1048 = vld [vmem:[%s1047] sm:$0xff]
        %v1049 = vld [vmem:[%s1047 + $0x8] sm:$0xff]
        %v1051 = vsel %vm514, %v1039, 0
        %v1054 = vsel %vm514, %v1040, 0
        %v1057 = vsel %vm514, %v1041, 0
        %v1060 = vsel %vm514, %v1042, 0
        %v1063 = vsel %vm514, %v1043, 0
        %v1066 = vsel %vm514, %v1044, 0
        %v1069 = vsel %vm514, %v1045, 0
        %v1072 = vsel %vm514, %v1046, 0
        %1074 = vmatpush.msra.mxu0 0.0
        %1075 = vmatpush.msra.mxu0 0.0
        %1076 = vmatpush.msra.mxu0 0.0
        %1077 = vmatpush.msra.mxu0 0.0
        %1078 = vmatpush.msra.mxu0 0.0
        %1079 = vmatpush.msra.mxu0 0.0
        %1080 = vmatpush.msra.mxu0 0.0
        %1081 = vmatpush.msra.mxu0 0.0
        %1082 = vmatpush.msra.mxu0 0.0
        %1083 = vmatpush.msra.mxu0 0.0
        %1084 = vmatpush.msra.mxu0 0.0
        %1085 = vmatpush.msra.mxu0 0.0
        %1086 = vmatpush.msra.mxu0 0.0
        %1087 = vmatpush.msra.mxu0 0.0
        %1088 = vmatpush.msra.mxu0 %v1049
        %1089 = vmatpush.msra.mxu0 %v1048
        %1090 = vmatmul.f32.gmra.mxu0 %v1051
        %v1091 = vpop.f32.mrf.mxu0
        %v1092 = vadd.f32 0.0, %v1091
        %1093 = vmatmul.f32.gmra.mxu0 %v1054
        %v1094 = vpop.f32.mrf.mxu0
        %v1095 = vadd.f32 0.0, %v1094
        %1096 = vmatmul.f32.gmra.mxu0 %v1057
        %v1097 = vpop.f32.mrf.mxu0
        %v1098 = vadd.f32 0.0, %v1097
        %1099 = vmatmul.f32.gmra.mxu0 %v1060
        %v1100 = vpop.f32.mrf.mxu0
        %v1101 = vadd.f32 0.0, %v1100
        %1102 = vmatmul.f32.gmra.mxu0 %v1063
        %v1103 = vpop.f32.mrf.mxu0
        %v1104 = vadd.f32 0.0, %v1103
        %1105 = vmatmul.f32.gmra.mxu0 %v1066
        %v1106 = vpop.f32.mrf.mxu0
        %v1107 = vadd.f32 0.0, %v1106
        %1108 = vmatmul.f32.gmra.mxu0 %v1069
        %v1109 = vpop.f32.mrf.mxu0
        %v1110 = vadd.f32 0.0, %v1109
        %1111 = vmatmul.f32.gmra.mxu0 %v1072
        %v1112 = vpop.f32.mrf.mxu0
        %v1113 = vadd.f32 0.0, %v1112
        %1114 = vdwg.mxu0
        %v1115 = vadd.f32 %v1030, %v1092
        %v1116 = vadd.f32 %v1031, %v1095
        %v1117 = vadd.f32 %v1032, %v1098
        %v1118 = vadd.f32 %v1033, %v1101
        %v1119 = vadd.f32 %v1034, %v1104
        %v1120 = vadd.f32 %v1035, %v1107
        %v1121 = vadd.f32 %v1036, %v1110
        %v1122 = vadd.f32 %v1037, %v1113
        %v1123 = vld [vmem:[%s1038 + $0x1] sm:$0xff]
        %v1124 = vld [vmem:[%s1038 + $0x11] sm:$0xff]
        %v1125 = vld [vmem:[%s1038 + $0x21] sm:$0xff]
        %v1126 = vld [vmem:[%s1038 + $0x31] sm:$0xff]
        %v1127 = vld [vmem:[%s1038 + $0x41] sm:$0xff]
        %v1128 = vld [vmem:[%s1038 + $0x51] sm:$0xff]
        %v1129 = vld [vmem:[%s1038 + $0x61] sm:$0xff]
        %v1130 = vld [vmem:[%s1038 + $0x71] sm:$0xff]
        %s1131 = scalar_lea.vmem %s3, 112
        %v1132 = vld [vmem:[%s1131] sm:$0xff]
        %v1133 = vld [vmem:[%s1131 + $0x8] sm:$0xff]
        %v1135 = vsel %vm514, %v1123, 0
        %v1138 = vsel %vm514, %v1124, 0
        %v1141 = vsel %vm514, %v1125, 0
        %v1144 = vsel %vm514, %v1126, 0
        %v1147 = vsel %vm514, %v1127, 0
        %v1150 = vsel %vm514, %v1128, 0
        %v1153 = vsel %vm514, %v1129, 0
        %v1156 = vsel %vm514, %v1130, 0
        %1158 = vmatpush.msra.mxu0 0.0
        %1159 = vmatpush.msra.mxu0 0.0
        %1160 = vmatpush.msra.mxu0 0.0
        %1161 = vmatpush.msra.mxu0 0.0
        %1162 = vmatpush.msra.mxu0 0.0
        %1163 = vmatpush.msra.mxu0 0.0
        %1164 = vmatpush.msra.mxu0 0.0
        %1165 = vmatpush.msra.mxu0 0.0
        %1166 = vmatpush.msra.mxu0 0.0
        %1167 = vmatpush.msra.mxu0 0.0
        %1168 = vmatpush.msra.mxu0 0.0
        %1169 = vmatpush.msra.mxu0 0.0
        %1170 = vmatpush.msra.mxu0 0.0
        %1171 = vmatpush.msra.mxu0 0.0
        %1172 = vmatpush.msra.mxu0 %v1133
        %1173 = vmatpush.msra.mxu0 %v1132
        %1174 = vmatmul.f32.gmra.mxu0 %v1135
        %v1175 = vpop.f32.mrf.mxu0
        %v1176 = vadd.f32 0.0, %v1175
        %1177 = vmatmul.f32.gmra.mxu0 %v1138
        %v1178 = vpop.f32.mrf.mxu0
        %v1179 = vadd.f32 0.0, %v1178
        %1180 = vmatmul.f32.gmra.mxu0 %v1141
        %v1181 = vpop.f32.mrf.mxu0
        %v1182 = vadd.f32 0.0, %v1181
        %1183 = vmatmul.f32.gmra.mxu0 %v1144
        %v1184 = vpop.f32.mrf.mxu0
        %v1185 = vadd.f32 0.0, %v1184
        %1186 = vmatmul.f32.gmra.mxu0 %v1147
        %v1187 = vpop.f32.mrf.mxu0
        %v1188 = vadd.f32 0.0, %v1187
        %1189 = vmatmul.f32.gmra.mxu0 %v1150
        %v1190 = vpop.f32.mrf.mxu0
        %v1191 = vadd.f32 0.0, %v1190
        %1192 = vmatmul.f32.gmra.mxu0 %v1153
        %v1193 = vpop.f32.mrf.mxu0
        %v1194 = vadd.f32 0.0, %v1193
        %1195 = vmatmul.f32.gmra.mxu0 %v1156
        %v1196 = vpop.f32.mrf.mxu0
        %v1197 = vadd.f32 0.0, %v1196
        %1198 = vdwg.mxu0
        %v1199 = vadd.f32 %v1115, %v1176
        %v1200 = vadd.f32 %v1116, %v1179
        %v1201 = vadd.f32 %v1117, %v1182
        %v1202 = vadd.f32 %v1118, %v1185
        %v1203 = vadd.f32 %v1119, %v1188
        %v1204 = vadd.f32 %v1120, %v1191
        %v1205 = vadd.f32 %v1121, %v1194
        %v1206 = vadd.f32 %v1122, %v1197
        %v1207 = vld [vmem:[%s1038 + $0x2] sm:$0xff]
        %v1208 = vld [vmem:[%s1038 + $0x12] sm:$0xff]
        %v1209 = vld [vmem:[%s1038 + $0x22] sm:$0xff]
        %v1210 = vld [vmem:[%s1038 + $0x32] sm:$0xff]
        %v1211 = vld [vmem:[%s1038 + $0x42] sm:$0xff]
        %v1212 = vld [vmem:[%s1038 + $0x52] sm:$0xff]
        %v1213 = vld [vmem:[%s1038 + $0x62] sm:$0xff]
        %v1214 = vld [vmem:[%s1038 + $0x72] sm:$0xff]
        %s1215 = scalar_lea.vmem %s3, 128
        %v1216 = vld [vmem:[%s1215] sm:$0xff]
        %v1217 = vld [vmem:[%s1215 + $0x8] sm:$0xff]
        %v1219 = vsel %vm514, %v1207, 0
        %v1222 = vsel %vm514, %v1208, 0
        %v1225 = vsel %vm514, %v1209, 0
        %v1228 = vsel %vm514, %v1210, 0
        %v1231 = vsel %vm514, %v1211, 0
        %v1234 = vsel %vm514, %v1212, 0
        %v1237 = vsel %vm514, %v1213, 0
        %v1240 = vsel %vm514, %v1214, 0
        %1242 = vmatpush.msra.mxu0 0.0
        %1243 = vmatpush.msra.mxu0 0.0
        %1244 = vmatpush.msra.mxu0 0.0
        %1245 = vmatpush.msra.mxu0 0.0
        %1246 = vmatpush.msra.mxu0 0.0
        %1247 = vmatpush.msra.mxu0 0.0
        %1248 = vmatpush.msra.mxu0 0.0
        %1249 = vmatpush.msra.mxu0 0.0
        %1250 = vmatpush.msra.mxu0 0.0
        %1251 = vmatpush.msra.mxu0 0.0
        %1252 = vmatpush.msra.mxu0 0.0
        %1253 = vmatpush.msra.mxu0 0.0
        %1254 = vmatpush.msra.mxu0 0.0
        %1255 = vmatpush.msra.mxu0 0.0
        %1256 = vmatpush.msra.mxu0 %v1217
        %1257 = vmatpush.msra.mxu0 %v1216
        %1258 = vmatmul.f32.gmra.mxu0 %v1219
        %v1259 = vpop.f32.mrf.mxu0
        %v1260 = vadd.f32 0.0, %v1259
        %1261 = vmatmul.f32.gmra.mxu0 %v1222
        %v1262 = vpop.f32.mrf.mxu0
        %v1263 = vadd.f32 0.0, %v1262
        %1264 = vmatmul.f32.gmra.mxu0 %v1225
        %v1265 = vpop.f32.mrf.mxu0
        %v1266 = vadd.f32 0.0, %v1265
        %1267 = vmatmul.f32.gmra.mxu0 %v1228
        %v1268 = vpop.f32.mrf.mxu0
        %v1269 = vadd.f32 0.0, %v1268
        %1270 = vmatmul.f32.gmra.mxu0 %v1231
        %v1271 = vpop.f32.mrf.mxu0
        %v1272 = vadd.f32 0.0, %v1271
        %1273 = vmatmul.f32.gmra.mxu0 %v1234
        %v1274 = vpop.f32.mrf.mxu0
        %v1275 = vadd.f32 0.0, %v1274
        %1276 = vmatmul.f32.gmra.mxu0 %v1237
        %v1277 = vpop.f32.mrf.mxu0
        %v1278 = vadd.f32 0.0, %v1277
        %1279 = vmatmul.f32.gmra.mxu0 %v1240
        %v1280 = vpop.f32.mrf.mxu0
        %v1281 = vadd.f32 0.0, %v1280
        %1282 = vdwg.mxu0
        %v1283 = vadd.f32 %v1199, %v1260
        %v1284 = vadd.f32 %v1200, %v1263
        %v1285 = vadd.f32 %v1201, %v1266
        %v1286 = vadd.f32 %v1202, %v1269
        %v1287 = vadd.f32 %v1203, %v1272
        %v1288 = vadd.f32 %v1204, %v1275
        %v1289 = vadd.f32 %v1205, %v1278
        %v1290 = vadd.f32 %v1206, %v1281
        %v1291 = vld [vmem:[%s4] sm:$0x1]
        %v1293 = vperm.slane %v1291, 0
        %v1295 = vadd.f32 %v1283, %v1293
        %v1296 = vadd.f32 %v1284, %v1293
        %v1297 = vadd.f32 %v1285, %v1293
        %v1298 = vadd.f32 %v1286, %v1293
        %v1299 = vadd.f32 %v1287, %v1293
        %v1300 = vadd.f32 %v1288, %v1293
        %v1301 = vadd.f32 %v1289, %v1293
        %v1302 = vadd.f32 %v1290, %v1293
        %v1303 = vmax.f32 %v1295, 0.0
        %v1304 = vmax.f32 %v1296, 0.0
        %v1305 = vmax.f32 %v1297, 0.0
        %v1306 = vmax.f32 %v1298, 0.0
        %v1307 = vmax.f32 %v1299, 0.0
        %v1308 = vmax.f32 %v1300, 0.0
        %v1309 = vmax.f32 %v1301, 0.0
        %v1310 = vmax.f32 %v1302, 0.0
        %vm1311 = vcmask 261120
        %v1312 = vsel %vm1311, %v1303, 0.0
        %v1313 = vsel %vm1311, %v1304, 0.0
        %v1314 = vadd.f32 %v1312, %v1313
        %v1315 = vsel %vm1311, %v1305, 0.0
        %v1316 = vadd.f32 %v1314, %v1315
        %v1317 = vsel %vm1311, %v1306, 0.0
        %v1318 = vadd.f32 %v1316, %v1317
        %v1319 = vsel %vm1311, %v1307, 0.0
        %v1320 = vadd.f32 %v1318, %v1319
        %v1321 = vsel %vm1311, %v1308, 0.0
        %v1322 = vadd.f32 %v1320, %v1321
        %v1323 = vsel %vm1311, %v1309, 0.0
        %v1324 = vadd.f32 %v1322, %v1323
        %v1325 = vsel %vm1311, %v1310, 0.0
        %v1326 = vadd.f32 %v1324, %v1325
        %v1327 = vrot.slane %v1326, 4
        %v1328 = vadd.f32 %v1326, %v1327
        %v1329 = vrot.slane %v1328, 2
        %v1330 = vadd.f32 %v1328, %v1329
        %v1331 = vrot.slane %v1330, 1
        %v1332 = vadd.f32 %v1330, %v1331
        %v1333 = vrcp.pop 64.0
        %v1334 = vmul.f32 64.0, %v1333
        %v1335 = vsub.f32 1.0, %v1334
        %v1336 = vmul.f32 %v1333, %v1335
        %v1337 = vadd.f32 %v1333, %v1336
        %vm1338 = vweird.f32 %v1333
        %v1339 = vsel %vm1338, %v1333, %v1337
        %v1340 = vmul.f32 %v1332, %v1339
        %vm1341 = vcmask 253952
        %1342 = vst.msk [vmem:[%s216] sm:$0x1] %vm1341, %v1340
        %s1343 = sand.u32 %s137, 1
        %s1344 = scalar_lea.sflag [#allocation4], %s1343
        %s1345 = sand.u32 %s137, 1
        %s1346 = scalar_lea.vmem [#allocation3], %s1345
        // Predicated region
        $region41: #{tpu_custom_call.1} parent=39 // pred_check
          %p1347 = pneg %p147
        $region42: #{tpu_custom_call.1} parent=39 // pred_check_branch
          %1349 = sbr.rel (%p1347) target = $region44
        $region43: #{tpu_custom_call.1} parent=39 // pred_region
          %1351 = vsyncadd %s1344, 0
          %s1352 = scalar_lea.hbm %s5, %s19
          %s1354 = sshll.u32 %s1346, 4
          %s1355 = int_to_ptr.vmem [resolvable:$true] %s1354
          %s1356 = sshll.u32 %s1352, 4
          %s1357 = int_to_ptr.hbm [resolvable:$true] %s1356
          %1359 = dma.vmem_to_hbm [thread:$0]  %s1355, 16, %s1357, %s1344
        $region44: #{tpu_custom_call.1} parent=39 // pred_fallthru
          _
      $region40: #{tpu_custom_call.1} parent=5 // pred_fallthru
        _
      %p1360 = scmp.le.s32.totalorder 2, %s14
      // Predicated region
      $region45: #{tpu_custom_call.1} parent=5 // pred_check
        %p1361 = pneg %p1360
      $region46: #{tpu_custom_call.1} parent=5 // pred_check_branch
        %1363 = sbr.rel (%p1361) target = $region48
      $region47: #{tpu_custom_call.1} parent=5 // pred_region
        %s1364 = ssub.s32 %s14, 2
        // Predicated region
        $region49: #{tpu_custom_call.1} parent=47 // pred_check
          %p1365 = pneg %p153
        $region50: #{tpu_custom_call.1} parent=47 // pred_check_branch
          %1367 = sbr.rel (%p1365) target = $region52
        $region51: #{tpu_custom_call.1} parent=47 // pred_region
          %s1368 = sand.u32 %s138, 1
          %s1369 = scalar_lea.sflag [#allocation4], %s1368
          %s1370 = sand.u32 %s138, 1
          %s1371 = scalar_lea.vmem [#allocation3], %s1370
          %1373 = dma.done %s1369, 16
        $region52: #{tpu_custom_call.1} parent=47 // pred_fallthru
          _
      $region48: #{tpu_custom_call.1} parent=5 // pred_fallthru
        _
    $region6: #{tpu_custom_call.1} parent=1 // loop_footer
      %s18 = sadd.s32 1, %s14
    $region7: #{tpu_custom_call.1} parent=1 // loop_footer_branch
      %13 = sbr.rel target = $region3
    $region8: #{tpu_custom_call.1} parent=1 // loop_exit
      _
    %1374 = vsyncpa [#allocation4], 1
    %s1375 = scalar_lea.sflag [#allocation4], 1
    %1376 = vsyncpa %s1375, 1

</llo_original>
